<compile_context>
chip_gen: v7x
topology: tpu7x:2x2x1
jax: 0.10.0
libtpu: 0.0.40
codegen_flags: <defaults>
</compile_context>

<pallas_src>
import jax
import jax.numpy as jnp
from jax.experimental import pallas as pl
from jax.experimental.pallas import tpu as pltpu

_EPS = 1e-5


# ----------------------------------------------------------------------------
# Banded conv weights with the W-direction 'SAME' padding folded in:
#   B[dy, x*Cin + c, w*Cout + f] = w[dy, x - w + pad, c, f]   if the tap is
#   in range, else 0.  Then for an H-halo-padded row buffer `rows`:
#   out[h, w*Cout+f] = sum_dy ( rows[h+dy, :] @ B[dy] )[w*Cout+f]
# ----------------------------------------------------------------------------
def _band_conv_weights(w_hwio, W, pad, dtype=jnp.bfloat16):
    ks, _, Cin, Cout = w_hwio.shape
    xs = jnp.arange(W)[:, None]                       # input column  (W, 1)
    ws = jnp.arange(W)[None, :]                       # output column (1, W)
    dxs = jnp.arange(ks)[:, None, None]               # (ks, 1, 1)
    ind = (xs[None] - ws[None] == dxs - pad).astype(w_hwio.dtype)   # (ks, W, W)
    # B[dy, x, c, w, f] = sum_dx ind[dx, x, w] * w[dy, dx, c, f]
    B = jnp.einsum('dxw,edcf->excwf', ind, w_hwio)
    return B.reshape(ks, W * Cin, W * Cout).astype(dtype)


def prepare_params(p, W):
    """Precompute (hoist) the banded bf16 conv weights; call once per model."""
    ks, _, Cin, Cout = p["w1"].shape
    pad = ks // 2
    B1 = _band_conv_weights(p["w1"], W, pad)                               # (ks, W*Cin, W*Cout)
    B2 = _band_conv_weights(p["w2"], W, pad)                               # (ks, W*Cout, W*Cout)
    Bs = _band_conv_weights(p["ws"].reshape(1, 1, Cin, Cout), W, 0)[0]     # (W*Cin, W*Cout)
    pp = dict(p)
    pp["B1s"] = B1.reshape(ks * W * Cin, W * Cout)   # K-stacked (dy-major) weights
    pp["B2s"] = B2.reshape(ks * W * Cout, W * Cout)
    pp["Bs"] = Bs
    return pp


def _scale_shift(s_rows, ss_rows, gamma, beta, count, W):
    """Finish the tiny BN stat reduction and return lane-tiled scale/shift."""
    Cout = gamma.shape[0]
    s = s_rows.sum(0).reshape(W, Cout).sum(0)          # (Cout,) sum
    ss = ss_rows.sum(0).reshape(W, Cout).sum(0)        # (Cout,) sum of squares
    mean = s / count
    var = jnp.maximum(ss / count - mean * mean, 0.0)   # biased variance (train mode)
    scale = gamma.astype(jnp.float32) * jax.lax.rsqrt(var + _EPS)
    shift = beta.astype(jnp.float32) - mean * scale
    # dense lane index = w*Cout + f  ->  repeat the per-channel vector W times
    return jnp.tile(scale, W), jnp.tile(shift, W)      # each (W*Cout,)


# ----------------------------------------------------------------------------
# Pass 1: fused conv3x3 + conv1x1 skip + BN partial stats (one MXU dot each).
# ----------------------------------------------------------------------------
def _make_conv1_skip_kernel(NB, H, W, Cin, Cout, pad):
    WCin, WC = W * Cin, W * Cout
    ks = 2 * pad + 1

    def kernel(x_ref, b1_ref, bs_ref, y1_ref, sk_ref, st_ref, xpad):
        # x_ref : (NB, H, W*Cin) f32      b1_ref: (ks*W*Cin, WC) bf16
        # bs_ref: (W*Cin, WC)  bf16       xpad  : (NB, H+2p, W*Cin) f32 scratch
        xv = x_ref[...]
        # Zero ONLY the H-halo rows each step (W padding lives in the weights).
        xpad[:, 0:pad, :] = jnp.zeros((NB, pad, WCin), xpad.dtype)
        xpad[:, pad + H:pad + H + pad, :] = jnp.zeros((NB, pad, WCin), xpad.dtype)
        xpad[:, pad:pad + H, :] = xv
        # Stack the dy-shifted rows along K -> single MXU dot with M = NB*H.
        lhs = jnp.concatenate([xpad[:, dy:dy + H, :] for dy in range(ks)],
                              axis=-1).reshape(NB * H, ks * WCin)
        acc = jnp.dot(lhs.astype(jnp.bfloat16), b1_ref[...],
                      preferred_element_type=jnp.float32)          # (NB*H, WC)
        # Fused 1x1 skip conv (block-diagonal banded weight), same M.
        sk = jnp.dot(xv.reshape(NB * H, WCin).astype(jnp.bfloat16), bs_ref[...],
                     preferred_element_type=jnp.float32)           # (NB*H, WC)
        # bf16 inter-pass intermediates, lane-dense stores (last dim = WC).
        y1_ref[...] = acc.reshape(NB, H, WC).astype(y1_ref.dtype)
        sk_ref[...] = sk.reshape(NB, H, WC).astype(sk_ref.dtype)
        # Fused BN partial stats from the f32 accumulators.
        st_ref[0, 0, :] = jnp.sum(acc, axis=0)
        st_ref[0, 1, :] = jnp.sum(acc * acc, axis=0)
        st_ref[0, 2, :] = jnp.sum(sk, axis=0)
        st_ref[0, 3, :] = jnp.sum(sk * sk, axis=0)

    return kernel


# ----------------------------------------------------------------------------
# Pass 2: conv3x3 with BN1 + ReLU fused into the prologue, + BN partial stats.
# ----------------------------------------------------------------------------
def _make_conv2_kernel(NB, H, W, Cout, pad):
    WC = W * Cout
    ks = 2 * pad + 1

    def kernel(y1_ref, s_ref, t_ref, b2_ref, y2_ref, st_ref, ypad):
        # y1_ref: (NB, H, WC) bf16   s_ref/t_ref: (1, WC) f32 (tiled scale/shift)
        # b2_ref: (ks*WC, WC) bf16   ypad: (NB, H+2p, WC) f32 scratch
        y1n = jnp.maximum(
            y1_ref[...].astype(jnp.float32) * s_ref[0] + t_ref[0], 0.0)
        ypad[:, 0:pad, :] = jnp.zeros((NB, pad, WC), ypad.dtype)
        ypad[:, pad + H:pad + H + pad, :] = jnp.zeros((NB, pad, WC), ypad.dtype)
        ypad[:, pad:pad + H, :] = y1n
        lhs = jnp.concatenate([ypad[:, dy:dy + H, :] for dy in range(ks)],
                              axis=-1).reshape(NB * H, ks * WC)
        acc = jnp.dot(lhs.astype(jnp.bfloat16), b2_ref[...],
                      preferred_element_type=jnp.float32)          # (NB*H, WC)
        y2_ref[...] = acc.reshape(NB, H, WC).astype(y2_ref.dtype)
        st_ref[0, 0, :] = jnp.sum(acc, axis=0)
        st_ref[0, 1, :] = jnp.sum(acc * acc, axis=0)

    return kernel


# ----------------------------------------------------------------------------
# Pass 3: BN+ReLU on both branches and add (pure elementwise, big blocks).
# ----------------------------------------------------------------------------
def _bn_relu_add_kernel(y2_ref, s2_ref, t2_ref, sk_ref, ss_ref, ts_ref, o_ref):
    y2 = y2_ref[...].astype(jnp.float32)
    sk = sk_ref[...].astype(jnp.float32)
    o_ref[...] = (jnp.maximum(y2 * s2_ref[0] + t2_ref[0], 0.0) +
                  jnp.maximum(sk * ss_ref[0] + ts_ref[0], 0.0))


# ----------------------------------------------------------------------------
# DoubleConv forward (expects params prepared by prepare_params()).
# ----------------------------------------------------------------------------
def double_conv_forward(x_nchw, pp):
    N, Cin, H, W = x_nchw.shape
    ks, _, _, Cout = pp["w1"].shape
    pad = ks // 2
    WCin, WC = W * Cin, W * Cout

    # Batch-block: flatten NB images into matmul M = NB*H per grid step.
    NB = 1
    for cand in range(1, N + 1):
        if N % cand == 0 and cand * H <= 256:
            NB = cand
    G = N // NB

    # NCHW -> lane-dense (N, H, W*Cin)
    x = jnp.transpose(x_nchw, (0, 2, 3, 1)).astype(jnp.float32).reshape(N, H, WCin)

    # ---- Pass 1: conv1 + skip + partial stats --------------------------------
    y1, sk, st1 = pl.pallas_call(
        _make_conv1_skip_kernel(NB, H, W, Cin, Cout, pad),
        out_shape=(jax.ShapeDtypeStruct((N, H, WC), jnp.bfloat16),
                   jax.ShapeDtypeStruct((N, H, WC), jnp.bfloat16),
                   jax.ShapeDtypeStruct((G, 4, WC), jnp.float32)),
        grid=(G,),
        in_specs=[pl.BlockSpec((NB, H, WCin), lambda g: (g, 0, 0)),
                  pl.BlockSpec((ks * WCin, WC), lambda g: (0, 0)),
                  pl.BlockSpec((WCin, WC), lambda g: (0, 0))],
        out_specs=[pl.BlockSpec((NB, H, WC), lambda g: (g, 0, 0)),
                   pl.BlockSpec((NB, H, WC), lambda g: (g, 0, 0)),
                   pl.BlockSpec((1, 4, WC), lambda g: (g, 0, 0))],
        scratch_shapes=[pltpu.VMEM((NB, H + 2 * pad, WCin), jnp.float32)],
        compiler_params=pltpu.CompilerParams(dimension_semantics=("parallel",)),
    )(x, pp["B1s"], pp["Bs"])

    count = N * H * W
    s1t, h1t = _scale_shift(st1[:, 0], st1[:, 1], pp["g1"], pp["b1"], count, W)
    sst, hst = _scale_shift(st1[:, 2], st1[:, 3], pp["gs"], pp["bs"], count, W)

    # ---- Pass 2: BN1+ReLU fused into conv2 + partial stats -------------------
    y2, st2 = pl.pallas_call(
        _make_conv2_kernel(NB, H, W, Cout, pad),
        out_shape=(jax.ShapeDtypeStruct((N, H, WC), jnp.float32),
                   jax.ShapeDtypeStruct((G, 2, WC), jnp.float32)),
        grid=(G,),
        in_specs=[pl.BlockSpec((NB, H, WC), lambda g: (g, 0, 0)),
                  pl.BlockSpec((1, WC), lambda g: (0, 0)),
                  pl.BlockSpec((1, WC), lambda g: (0, 0)),
                  pl.BlockSpec((ks * WC, WC), lambda g: (0, 0))],
        out_specs=[pl.BlockSpec((NB, H, WC), lambda g: (g, 0, 0)),
                   pl.BlockSpec((1, 2, WC), lambda g: (g, 0, 0))],
        scratch_shapes=[pltpu.VMEM((NB, H + 2 * pad, WC), jnp.float32)],
        compiler_params=pltpu.CompilerParams(dimension_semantics=("parallel",)),
    )(y1, s1t[None], h1t[None], pp["B2s"])

    s2t, h2t = _scale_shift(st2[:, 0], st2[:, 1], pp["g2"], pp["b2"], count, W)

    # ---- Pass 3: BN+ReLU on both branches and add -----------------------------
    out = pl.pallas_call(
        _bn_relu_add_kernel,
        out_shape=jax.ShapeDtypeStruct((N, H, WC), jnp.float32),
        grid=(G,),
        in_specs=[pl.BlockSpec((NB, H, WC), lambda g: (g, 0, 0)),
                  pl.BlockSpec((1, WC), lambda g: (0, 0)),
                  pl.BlockSpec((1, WC), lambda g: (0, 0)),
                  pl.BlockSpec((NB, H, WC), lambda g: (g, 0, 0)),
                  pl.BlockSpec((1, WC), lambda g: (0, 0)),
                  pl.BlockSpec((1, WC), lambda g: (0, 0))],
        out_specs=pl.BlockSpec((NB, H, WC), lambda g: (g, 0, 0)),
        compiler_params=pltpu.CompilerParams(dimension_semantics=("parallel",)),
    )(y2, s2t[None], h2t[None], sk, sst[None], hst[None])

    # lane-dense (N, H, W*Cout) -> NCHW
    return jnp.transpose(out.reshape(N, H, W, Cout), (0, 3, 1, 2))


# ----------------------------------------------------------------------------
# Pure-JAX f32 reference for validation.
# ----------------------------------------------------------------------------
def reference(x_nchw, p):
    x = jnp.transpose(x_nchw, (0, 2, 3, 1)).astype(jnp.float32)

    def conv(x, w):
        return jax.lax.conv_general_dilated(
            x, w, (1, 1), "SAME", dimension_numbers=("NHWC", "HWIO", "NHWC"))

    def bnr(y, g, b):
        mean = y.mean(axis=(0, 1, 2), keepdims=True)
        var = ((y - mean) ** 2).mean(axis=(0, 1, 2), keepdims=True)
        return jnp.maximum((y - mean) / jnp.sqrt(var + _EPS)
                           * g.reshape(1, 1, 1, -1) + b.reshape(1, 1, 1, -1), 0.0)

    y1 = bnr(conv(x, p["w1"]), p["g1"], p["b1"])
    y2 = bnr(conv(y1, p["w2"]), p["g2"], p["b2"])
    sk = bnr(conv(x, p["ws"]), p["gs"], p["bs"])
    return jnp.transpose(y2 + sk, (0, 3, 1, 2))


if __name__ == "__main__":
    N, Cin, Cout, H, W = 2, 4, 8, 16, 16
    key = jax.random.PRNGKey(0)
    keys = jax.random.split(key, 8)

    x = jax.random.normal(keys[0], (N, Cin, H, W), jnp.float32)
    params = {
        # conv weights in HWIO (PyTorch OIHW transposed), no bias (bias=False).
        "w1": 0.2 * jax.random.normal(keys[1], (3, 3, Cin, Cout), jnp.float32),
        "w2": 0.2 * jax.random.normal(keys[2], (3, 3, Cout, Cout), jnp.float32),
        "ws": 0.2 * jax.random.normal(keys[3], (1, 1, Cin, Cout), jnp.float32),
        # BN affine params (perturbed from the default gamma=1 / beta=0 init).
        "g1": 1.0 + 0.1 * jax.random.normal(keys[4], (Cout,), jnp.float32),
        "b1": 0.1 * jax.random.normal(keys[5], (Cout,), jnp.float32),
        "g2": 1.0 + 0.1 * jax.random.normal(keys[6], (Cout,), jnp.float32),
        "b2": 0.1 * jax.random.normal(keys[7], (Cout,), jnp.float32),
        "gs": jnp.ones((Cout,), jnp.float32),
        "bs": jnp.zeros((Cout,), jnp.float32),
    }

    # Banded weights are prepared ONCE (hoisted out of the per-call forward).
    pp = prepare_params(params, W)
    fwd = jax.jit(double_conv_forward)

    out = jax.block_until_ready(fwd(x, pp))
    ref = jax.block_until_ready(reference(x, params))

    assert out.shape == (N, Cout, H, W), out.shape
    err = float(jnp.max(jnp.abs(out - ref)))
    # bf16 MXU operands + bf16 inter-pass intermediates -> relaxed tolerance.
    assert jnp.allclose(out, ref, atol=7.5e-2, rtol=7.5e-2), f"max abs err {err}"
    print("KERNEL_OK")
</pallas_src>

<mosaic_0001>
module attributes {stable_mosaic.version = 11 : i64} {
  func.func @kernel(%arg0: i32, %arg1: memref<2x16x64xf32, #tpu.memory_space<vmem>>, %arg2: memref<192x128xbf16, #tpu.memory_space<vmem>>, %arg3: memref<64x128xbf16, #tpu.memory_space<vmem>>, %arg4: memref<2x16x128xbf16, #tpu.memory_space<vmem>>, %arg5: memref<2x16x128xbf16, #tpu.memory_space<vmem>>, %arg6: memref<1x4x128xf32, #tpu.memory_space<vmem>>, %arg7: memref<2x18x64xf32, #tpu.memory_space<vmem>>) attributes {dimension_semantics = [#tpu.dimension_semantics<parallel>], iteration_bounds = array<i64: 1>, scalar_prefetch = 0 : i64, scratch_operands = 1 : i64, tpu.core_type = #tpu.core_type<tc>, window_params = [{transform_indices = @transform_0, window_bounds = array<i64: 2, 16, 64>}, {pipeline_mode = #tpu.pipeline_mode<synchronous>, transform_indices = @transform_1, window_bounds = array<i64: 192, 128>}, {pipeline_mode = #tpu.pipeline_mode<synchronous>, transform_indices = @transform_2, window_bounds = array<i64: 64, 128>}, {transform_indices = @transform_3, window_bounds = array<i64: 2, 16, 128>}, {transform_indices = @transform_4, window_bounds = array<i64: 2, 16, 128>}, {transform_indices = @transform_5, window_bounds = array<i64: 1, 4, 128>}]} {
    %c0 = arith.constant 0 : index
    %c0_0 = arith.constant 0 : index
    %c0_1 = arith.constant 0 : index
    %0 = vector.load %arg1[%c0, %c0_0, %c0_1] : memref<2x16x64xf32, #tpu.memory_space<vmem>>, vector<2x16x64xf32>
    %cst = arith.constant 0.000000e+00 : f32
    %1 = vector.broadcast %cst : f32 to vector<2x1x64xf32>
    %c0_2 = arith.constant 0 : index
    %c0_3 = arith.constant 0 : index
    %c0_4 = arith.constant 0 : index
    %2 = vector.load %arg7[%c0_2, %c0_3, %c0_4] : memref<2x18x64xf32, #tpu.memory_space<vmem>>, vector<2x1x64xf32>
    tpu.vector_store %arg7[%c0_2, %c0_3, %c0_4], %1 {strides = array<i32>} : memref<2x18x64xf32, #tpu.memory_space<vmem>>, vector<2x1x64xf32>,
    %cst_5 = arith.constant 0.000000e+00 : f32
    %3 = vector.broadcast %cst_5 : f32 to vector<2x1x64xf32>
    %c0_6 = arith.constant 0 : index
    %c17 = arith.constant 17 : index
    %c0_7 = arith.constant 0 : index
    %4 = vector.load %arg7[%c0_6, %c17, %c0_7] : memref<2x18x64xf32, #tpu.memory_space<vmem>>, vector<2x1x64xf32>
    tpu.vector_store %arg7[%c0_6, %c17, %c0_7], %3 {strides = array<i32>} : memref<2x18x64xf32, #tpu.memory_space<vmem>>, vector<2x1x64xf32>,
    %c0_8 = arith.constant 0 : index
    %c1 = arith.constant 1 : index
    %c0_9 = arith.constant 0 : index
    %5 = vector.load %arg7[%c0_8, %c1, %c0_9] : memref<2x18x64xf32, #tpu.memory_space<vmem>>, vector<2x16x64xf32>
    tpu.vector_store %arg7[%c0_8, %c1, %c0_9], %0 {strides = array<i32>} : memref<2x18x64xf32, #tpu.memory_space<vmem>>, vector<2x16x64xf32>,
    %c0_10 = arith.constant 0 : index
    %c0_11 = arith.constant 0 : index
    %c0_12 = arith.constant 0 : index
    %6 = vector.load %arg7[%c0_10, %c0_11, %c0_12] : memref<2x18x64xf32, #tpu.memory_space<vmem>>, vector<2x16x64xf32>
    %c0_13 = arith.constant 0 : index
    %c1_14 = arith.constant 1 : index
    %c0_15 = arith.constant 0 : index
    %7 = vector.load %arg7[%c0_13, %c1_14, %c0_15] : memref<2x18x64xf32, #tpu.memory_space<vmem>>, vector<2x16x64xf32>
    %c0_16 = arith.constant 0 : index
    %c2 = arith.constant 2 : index
    %c0_17 = arith.constant 0 : index
    %8 = vector.load %arg7[%c0_16, %c2, %c0_17] : memref<2x18x64xf32, #tpu.memory_space<vmem>>, vector<2x16x64xf32>
    %9 = tpu.concatenate %6, %7, %8 in 2 : vector<2x16x64xf32>, vector<2x16x64xf32>, vector<2x16x64xf32> -> vector<2x16x192xf32>
    %10 = vector.shape_cast %9 : vector<2x16x192xf32> to vector<32x192xf32>
    %11 = arith.truncf %10 : vector<32x192xf32> to vector<32x192xbf16>
    %c0_18 = arith.constant 0 : index
    %c0_19 = arith.constant 0 : index
    %12 = vector.load %arg2[%c0_18, %c0_19] : memref<192x128xbf16, #tpu.memory_space<vmem>>, vector<192x128xbf16>
    %cst_20 = arith.constant dense<0.000000e+00> : vector<32x128xf32>
    %13 = tpu.matmul %11, %12, %cst_20 {dimension_numbers = #tpu.dot_dimension_numbers<[1], [0], [0], [1], [0, 0, 1, 1], [], []>} : vector<32x192xbf16>, vector<192x128xbf16>, vector<32x128xf32> -> vector<32x128xf32>
    %14 = vector.shape_cast %0 : vector<2x16x64xf32> to vector<32x64xf32>
    %15 = arith.truncf %14 : vector<32x64xf32> to vector<32x64xbf16>
    %c0_21 = arith.constant 0 : index
    %c0_22 = arith.constant 0 : index
    %16 = vector.load %arg3[%c0_21, %c0_22] : memref<64x128xbf16, #tpu.memory_space<vmem>>, vector<64x128xbf16>
    %cst_23 = arith.constant dense<0.000000e+00> : vector<32x128xf32>
    %17 = tpu.matmul %15, %16, %cst_23 {dimension_numbers = #tpu.dot_dimension_numbers<[1], [0], [0], [1], [0, 0, 1, 1], [], []>} : vector<32x64xbf16>, vector<64x128xbf16>, vector<32x128xf32> -> vector<32x128xf32>
    %18 = vector.shape_cast %13 : vector<32x128xf32> to vector<2x16x128xf32>
    %19 = arith.truncf %18 : vector<2x16x128xf32> to vector<2x16x128xbf16>
    %c0_24 = arith.constant 0 : index
    %c0_25 = arith.constant 0 : index
    %c0_26 = arith.constant 0 : index
    %20 = vector.load %arg4[%c0_24, %c0_25, %c0_26] : memref<2x16x128xbf16, #tpu.memory_space<vmem>>, vector<2x16x128xbf16>
    tpu.vector_store %arg4[%c0_24, %c0_25, %c0_26], %19 {strides = array<i32>} : memref<2x16x128xbf16, #tpu.memory_space<vmem>>, vector<2x16x128xbf16>,
    %21 = vector.shape_cast %17 : vector<32x128xf32> to vector<2x16x128xf32>
    %22 = arith.truncf %21 : vector<2x16x128xf32> to vector<2x16x128xbf16>
    %c0_27 = arith.constant 0 : index
    %c0_28 = arith.constant 0 : index
    %c0_29 = arith.constant 0 : index
    %23 = vector.load %arg5[%c0_27, %c0_28, %c0_29] : memref<2x16x128xbf16, #tpu.memory_space<vmem>>, vector<2x16x128xbf16>
    tpu.vector_store %arg5[%c0_27, %c0_28, %c0_29], %22 {strides = array<i32>} : memref<2x16x128xbf16, #tpu.memory_space<vmem>>, vector<2x16x128xbf16>,
    %cst_30 = arith.constant dense<0.000000e+00> : vector<128xf32>
    %24 = vector.multi_reduction <add>, %13, %cst_30 [0] : vector<32x128xf32> to vector<128xf32>
    %c0_31 = arith.constant 0 : index
    %c0_32 = arith.constant 0 : index
    %c0_33 = arith.constant 0 : index
    %25 = vector.load %arg6[%c0_31, %c0_32, %c0_33] : memref<1x4x128xf32, #tpu.memory_space<vmem>>, vector<1x1x128xf32>
    %26 = vector.shape_cast %25 : vector<1x1x128xf32> to vector<128xf32>
    %27 = vector.shape_cast %24 : vector<128xf32> to vector<1x1x128xf32>
    tpu.vector_store %arg6[%c0_31, %c0_32, %c0_33], %27 {strides = array<i32>} : memref<1x4x128xf32, #tpu.memory_space<vmem>>, vector<1x1x128xf32>,
    %28 = arith.mulf %13, %13 : vector<32x128xf32>
    %cst_34 = arith.constant dense<0.000000e+00> : vector<128xf32>
    %29 = vector.multi_reduction <add>, %28, %cst_34 [0] : vector<32x128xf32> to vector<128xf32>
    %c0_35 = arith.constant 0 : index
    %c1_36 = arith.constant 1 : index
    %c0_37 = arith.constant 0 : index
    %30 = vector.load %arg6[%c0_35, %c1_36, %c0_37] : memref<1x4x128xf32, #tpu.memory_space<vmem>>, vector<1x1x128xf32>
    %31 = vector.shape_cast %30 : vector<1x1x128xf32> to vector<128xf32>
    %32 = vector.shape_cast %29 : vector<128xf32> to vector<1x1x128xf32>
    tpu.vector_store %arg6[%c0_35, %c1_36, %c0_37], %32 {strides = array<i32>} : memref<1x4x128xf32, #tpu.memory_space<vmem>>, vector<1x1x128xf32>,
    %cst_38 = arith.constant dense<0.000000e+00> : vector<128xf32>
    %33 = vector.multi_reduction <add>, %17, %cst_38 [0] : vector<32x128xf32> to vector<128xf32>
    %c0_39 = arith.constant 0 : index
    %c2_40 = arith.constant 2 : index
    %c0_41 = arith.constant 0 : index
    %34 = vector.load %arg6[%c0_39, %c2_40, %c0_41] : memref<1x4x128xf32, #tpu.memory_space<vmem>>, vector<1x1x128xf32>
    %35 = vector.shape_cast %34 : vector<1x1x128xf32> to vector<128xf32>
    %36 = vector.shape_cast %33 : vector<128xf32> to vector<1x1x128xf32>
    tpu.vector_store %arg6[%c0_39, %c2_40, %c0_41], %36 {strides = array<i32>} : memref<1x4x128xf32, #tpu.memory_space<vmem>>, vector<1x1x128xf32>,
    %37 = arith.mulf %17, %17 : vector<32x128xf32>
    %cst_42 = arith.constant dense<0.000000e+00> : vector<128xf32>
    %38 = vector.multi_reduction <add>, %37, %cst_42 [0] : vector<32x128xf32> to vector<128xf32>
    %c0_43 = arith.constant 0 : index
    %c3 = arith.constant 3 : index
    %c0_44 = arith.constant 0 : index
    %39 = vector.load %arg6[%c0_43, %c3, %c0_44] : memref<1x4x128xf32, #tpu.memory_space<vmem>>, vector<1x1x128xf32>
    %40 = vector.shape_cast %39 : vector<1x1x128xf32> to vector<128xf32>
    %41 = vector.shape_cast %38 : vector<128xf32> to vector<1x1x128xf32>
    tpu.vector_store %arg6[%c0_43, %c3, %c0_44], %41 {strides = array<i32>} : memref<1x4x128xf32, #tpu.memory_space<vmem>>, vector<1x1x128xf32>,
    return
  }
  func.func @transform_0(%arg0: i32) -> (i32, i32, i32) {
    %c0_i32 = arith.constant 0 : i32
    %c0_i32_0 = arith.constant 0 : i32
    %c0_i32_1 = arith.constant 0 : i32
    return %arg0, %c0_i32, %c0_i32_0 : i32, i32, i32
  }
  func.func @transform_1(%arg0: i32) -> (i32, i32) {
    %c0_i32 = arith.constant 0 : i32
    %c0_i32_0 = arith.constant 0 : i32
    %c0_i32_1 = arith.constant 0 : i32
    return %c0_i32, %c0_i32_0 : i32, i32
  }
  func.func @transform_2(%arg0: i32) -> (i32, i32) {
    %c0_i32 = arith.constant 0 : i32
    %c0_i32_0 = arith.constant 0 : i32
    %c0_i32_1 = arith.constant 0 : i32
    return %c0_i32, %c0_i32_0 : i32, i32
  }
  func.func @transform_3(%arg0: i32) -> (i32, i32, i32) {
    %c0_i32 = arith.constant 0 : i32
    %c0_i32_0 = arith.constant 0 : i32
    %c0_i32_1 = arith.constant 0 : i32
    return %arg0, %c0_i32, %c0_i32_0 : i32, i32, i32
  }
  func.func @transform_4(%arg0: i32) -> (i32, i32, i32) {
    %c0_i32 = arith.constant 0 : i32
    %c0_i32_0 = arith.constant 0 : i32
    %c0_i32_1 = arith.constant 0 : i32
    return %arg0, %c0_i32, %c0_i32_0 : i32, i32, i32
  }
  func.func @transform_5(%arg0: i32) -> (i32, i32, i32) {
    %c0_i32 = arith.constant 0 : i32
    %c0_i32_0 = arith.constant 0 : i32
    %c0_i32_1 = arith.constant 0 : i32
    return %arg0, %c0_i32, %c0_i32_0 : i32, i32, i32
  }
}

module attributes {stable_mosaic.version = 11 : i64} {
  func.func @kernel(%arg0: i32, %arg1: memref<2x16x128xbf16, #tpu.memory_space<vmem>>, %arg2: memref<1x128xf32, #tpu.memory_space<vmem>>, %arg3: memref<1x128xf32, #tpu.memory_space<vmem>>, %arg4: memref<384x128xbf16, #tpu.memory_space<vmem>>, %arg5: memref<2x16x128xf32, #tpu.memory_space<vmem>>, %arg6: memref<1x2x128xf32, #tpu.memory_space<vmem>>, %arg7: memref<2x18x128xf32, #tpu.memory_space<vmem>>) attributes {dimension_semantics = [#tpu.dimension_semantics<parallel>], iteration_bounds = array<i64: 1>, scalar_prefetch = 0 : i64, scratch_operands = 1 : i64, tpu.core_type = #tpu.core_type<tc>, window_params = [{transform_indices = @transform_0, window_bounds = array<i64: 2, 16, 128>}, {pipeline_mode = #tpu.pipeline_mode<synchronous>, transform_indices = @transform_1, window_bounds = array<i64: 1, 128>}, {pipeline_mode = #tpu.pipeline_mode<synchronous>, transform_indices = @transform_2, window_bounds = array<i64: 1, 128>}, {pipeline_mode = #tpu.pipeline_mode<synchronous>, transform_indices = @transform_3, window_bounds = array<i64: 384, 128>}, {transform_indices = @transform_4, window_bounds = array<i64: 2, 16, 128>}, {transform_indices = @transform_5, window_bounds = array<i64: 1, 2, 128>}]} {
    %c0 = arith.constant 0 : index
    %c0_0 = arith.constant 0 : index
    %c0_1 = arith.constant 0 : index
    %0 = vector.load %arg1[%c0, %c0_0, %c0_1] : memref<2x16x128xbf16, #tpu.memory_space<vmem>>, vector<2x16x128xbf16>
    %1 = arith.extf %0 : vector<2x16x128xbf16> to vector<2x16x128xf32>
    %c0_2 = arith.constant 0 : index
    %c0_3 = arith.constant 0 : index
    %2 = vector.load %arg2[%c0_2, %c0_3] : memref<1x128xf32, #tpu.memory_space<vmem>>, vector<1x128xf32>
    %3 = vector.shape_cast %2 : vector<1x128xf32> to vector<128xf32>
    %4 = vector.shape_cast %3 : vector<128xf32> to vector<1x1x128xf32>
    %5 = vector.broadcast %4 : vector<1x1x128xf32> to vector<2x16x128xf32>
    %6 = arith.mulf %1, %5 : vector<2x16x128xf32>
    %c0_4 = arith.constant 0 : index
    %c0_5 = arith.constant 0 : index
    %7 = vector.load %arg3[%c0_4, %c0_5] : memref<1x128xf32, #tpu.memory_space<vmem>>, vector<1x128xf32>
    %8 = vector.shape_cast %7 : vector<1x128xf32> to vector<128xf32>
    %9 = vector.shape_cast %8 : vector<128xf32> to vector<1x1x128xf32>
    %10 = vector.broadcast %9 : vector<1x1x128xf32> to vector<2x16x128xf32>
    %11 = arith.addf %6, %10 : vector<2x16x128xf32>
    %cst = arith.constant 0.000000e+00 : f32
    %12 = vector.broadcast %cst : f32 to vector<2x16x128xf32>
    %13 = arith.maximumf %11, %12 : vector<2x16x128xf32>
    %cst_6 = arith.constant 0.000000e+00 : f32
    %14 = vector.broadcast %cst_6 : f32 to vector<2x1x128xf32>
    %c0_7 = arith.constant 0 : index
    %c0_8 = arith.constant 0 : index
    %c0_9 = arith.constant 0 : index
    %15 = vector.load %arg7[%c0_7, %c0_8, %c0_9] : memref<2x18x128xf32, #tpu.memory_space<vmem>>, vector<2x1x128xf32>
    tpu.vector_store %arg7[%c0_7, %c0_8, %c0_9], %14 {strides = array<i32>} : memref<2x18x128xf32, #tpu.memory_space<vmem>>, vector<2x1x128xf32>,
    %cst_10 = arith.constant 0.000000e+00 : f32
    %16 = vector.broadcast %cst_10 : f32 to vector<2x1x128xf32>
    %c0_11 = arith.constant 0 : index
    %c17 = arith.constant 17 : index
    %c0_12 = arith.constant 0 : index
    %17 = vector.load %arg7[%c0_11, %c17, %c0_12] : memref<2x18x128xf32, #tpu.memory_space<vmem>>, vector<2x1x128xf32>
    tpu.vector_store %arg7[%c0_11, %c17, %c0_12], %16 {strides = array<i32>} : memref<2x18x128xf32, #tpu.memory_space<vmem>>, vector<2x1x128xf32>,
    %c0_13 = arith.constant 0 : index
    %c1 = arith.constant 1 : index
    %c0_14 = arith.constant 0 : index
    %18 = vector.load %arg7[%c0_13, %c1, %c0_14] : memref<2x18x128xf32, #tpu.memory_space<vmem>>, vector<2x16x128xf32>
    tpu.vector_store %arg7[%c0_13, %c1, %c0_14], %13 {strides = array<i32>} : memref<2x18x128xf32, #tpu.memory_space<vmem>>, vector<2x16x128xf32>,
    %c0_15 = arith.constant 0 : index
    %c0_16 = arith.constant 0 : index
    %c0_17 = arith.constant 0 : index
    %19 = vector.load %arg7[%c0_15, %c0_16, %c0_17] : memref<2x18x128xf32, #tpu.memory_space<vmem>>, vector<2x16x128xf32>
    %c0_18 = arith.constant 0 : index
    %c1_19 = arith.constant 1 : index
    %c0_20 = arith.constant 0 : index
    %20 = vector.load %arg7[%c0_18, %c1_19, %c0_20] : memref<2x18x128xf32, #tpu.memory_space<vmem>>, vector<2x16x128xf32>
    %c0_21 = arith.constant 0 : index
    %c2 = arith.constant 2 : index
    %c0_22 = arith.constant 0 : index
    %21 = vector.load %arg7[%c0_21, %c2, %c0_22] : memref<2x18x128xf32, #tpu.memory_space<vmem>>, vector<2x16x128xf32>
    %22 = tpu.concatenate %19, %20, %21 in 2 : vector<2x16x128xf32>, vector<2x16x128xf32>, vector<2x16x128xf32> -> vector<2x16x384xf32>
    %23 = vector.shape_cast %22 : vector<2x16x384xf32> to vector<32x384xf32>
    %24 = arith.truncf %23 : vector<32x384xf32> to vector<32x384xbf16>
    %c0_23 = arith.constant 0 : index
    %c0_24 = arith.constant 0 : index
    %25 = vector.load %arg4[%c0_23, %c0_24] : memref<384x128xbf16, #tpu.memory_space<vmem>>, vector<384x128xbf16>
    %cst_25 = arith.constant dense<0.000000e+00> : vector<32x128xf32>
    %26 = tpu.matmul %24, %25, %cst_25 {dimension_numbers = #tpu.dot_dimension_numbers<[1], [0], [0], [1], [0, 0, 1, 1], [], []>} : vector<32x384xbf16>, vector<384x128xbf16>, vector<32x128xf32> -> vector<32x128xf32>
    %27 = vector.shape_cast %26 : vector<32x128xf32> to vector<2x16x128xf32>
    %c0_26 = arith.constant 0 : index
    %c0_27 = arith.constant 0 : index
    %c0_28 = arith.constant 0 : index
    %28 = vector.load %arg5[%c0_26, %c0_27, %c0_28] : memref<2x16x128xf32, #tpu.memory_space<vmem>>, vector<2x16x128xf32>
    tpu.vector_store %arg5[%c0_26, %c0_27, %c0_28], %27 {strides = array<i32>} : memref<2x16x128xf32, #tpu.memory_space<vmem>>, vector<2x16x128xf32>,
    %cst_29 = arith.constant dense<0.000000e+00> : vector<128xf32>
    %29 = vector.multi_reduction <add>, %26, %cst_29 [0] : vector<32x128xf32> to vector<128xf32>
    %c0_30 = arith.constant 0 : index
    %c0_31 = arith.constant 0 : index
    %c0_32 = arith.constant 0 : index
    %30 = vector.load %arg6[%c0_30, %c0_31, %c0_32] : memref<1x2x128xf32, #tpu.memory_space<vmem>>, vector<1x1x128xf32>
    %31 = vector.shape_cast %30 : vector<1x1x128xf32> to vector<128xf32>
    %32 = vector.shape_cast %29 : vector<128xf32> to vector<1x1x128xf32>
    tpu.vector_store %arg6[%c0_30, %c0_31, %c0_32], %32 {strides = array<i32>} : memref<1x2x128xf32, #tpu.memory_space<vmem>>, vector<1x1x128xf32>,
    %33 = arith.mulf %26, %26 : vector<32x128xf32>
    %cst_33 = arith.constant dense<0.000000e+00> : vector<128xf32>
    %34 = vector.multi_reduction <add>, %33, %cst_33 [0] : vector<32x128xf32> to vector<128xf32>
    %c0_34 = arith.constant 0 : index
    %c1_35 = arith.constant 1 : index
    %c0_36 = arith.constant 0 : index
    %35 = vector.load %arg6[%c0_34, %c1_35, %c0_36] : memref<1x2x128xf32, #tpu.memory_space<vmem>>, vector<1x1x128xf32>
    %36 = vector.shape_cast %35 : vector<1x1x128xf32> to vector<128xf32>
    %37 = vector.shape_cast %34 : vector<128xf32> to vector<1x1x128xf32>
    tpu.vector_store %arg6[%c0_34, %c1_35, %c0_36], %37 {strides = array<i32>} : memref<1x2x128xf32, #tpu.memory_space<vmem>>, vector<1x1x128xf32>,
    return
  }
  func.func @transform_0(%arg0: i32) -> (i32, i32, i32) {
    %c0_i32 = arith.constant 0 : i32
    %c0_i32_0 = arith.constant 0 : i32
    %c0_i32_1 = arith.constant 0 : i32
    return %arg0, %c0_i32, %c0_i32_0 : i32, i32, i32
  }
  func.func @transform_1(%arg0: i32) -> (i32, i32) {
    %c0_i32 = arith.constant 0 : i32
    %c0_i32_0 = arith.constant 0 : i32
    %c0_i32_1 = arith.constant 0 : i32
    return %c0_i32, %c0_i32_0 : i32, i32
  }
  func.func @transform_2(%arg0: i32) -> (i32, i32) {
    %c0_i32 = arith.constant 0 : i32
    %c0_i32_0 = arith.constant 0 : i32
    %c0_i32_1 = arith.constant 0 : i32
    return %c0_i32, %c0_i32_0 : i32, i32
  }
  func.func @transform_3(%arg0: i32) -> (i32, i32) {
    %c0_i32 = arith.constant 0 : i32
    %c0_i32_0 = arith.constant 0 : i32
    %c0_i32_1 = arith.constant 0 : i32
    return %c0_i32, %c0_i32_0 : i32, i32
  }
  func.func @transform_4(%arg0: i32) -> (i32, i32, i32) {
    %c0_i32 = arith.constant 0 : i32
    %c0_i32_0 = arith.constant 0 : i32
    %c0_i32_1 = arith.constant 0 : i32
    return %arg0, %c0_i32, %c0_i32_0 : i32, i32, i32
  }
  func.func @transform_5(%arg0: i32) -> (i32, i32, i32) {
    %c0_i32 = arith.constant 0 : i32
    %c0_i32_0 = arith.constant 0 : i32
    %c0_i32_1 = arith.constant 0 : i32
    return %arg0, %c0_i32, %c0_i32_0 : i32, i32, i32
  }
}

module attributes {stable_mosaic.version = 11 : i64} {
  func.func @_bn_relu_add_kernel(%arg0: i32, %arg1: memref<2x16x128xf32, #tpu.memory_space<vmem>>, %arg2: memref<1x128xf32, #tpu.memory_space<vmem>>, %arg3: memref<1x128xf32, #tpu.memory_space<vmem>>, %arg4: memref<2x16x128xbf16, #tpu.memory_space<vmem>>, %arg5: memref<1x128xf32, #tpu.memory_space<vmem>>, %arg6: memref<1x128xf32, #tpu.memory_space<vmem>>, %arg7: memref<2x16x128xf32, #tpu.memory_space<vmem>>) attributes {dimension_semantics = [#tpu.dimension_semantics<parallel>], iteration_bounds = array<i64: 1>, scalar_prefetch = 0 : i64, scratch_operands = 0 : i64, tpu.core_type = #tpu.core_type<tc>, window_params = [{transform_indices = @transform_0, window_bounds = array<i64: 2, 16, 128>}, {pipeline_mode = #tpu.pipeline_mode<synchronous>, transform_indices = @transform_1, window_bounds = array<i64: 1, 128>}, {pipeline_mode = #tpu.pipeline_mode<synchronous>, transform_indices = @transform_2, window_bounds = array<i64: 1, 128>}, {transform_indices = @transform_3, window_bounds = array<i64: 2, 16, 128>}, {pipeline_mode = #tpu.pipeline_mode<synchronous>, transform_indices = @transform_4, window_bounds = array<i64: 1, 128>}, {pipeline_mode = #tpu.pipeline_mode<synchronous>, transform_indices = @transform_5, window_bounds = array<i64: 1, 128>}, {transform_indices = @transform_6, window_bounds = array<i64: 2, 16, 128>}]} {
    %c0 = arith.constant 0 : index
    %c0_0 = arith.constant 0 : index
    %c0_1 = arith.constant 0 : index
    %0 = vector.load %arg1[%c0, %c0_0, %c0_1] : memref<2x16x128xf32, #tpu.memory_space<vmem>>, vector<2x16x128xf32>
    %c0_2 = arith.constant 0 : index
    %c0_3 = arith.constant 0 : index
    %c0_4 = arith.constant 0 : index
    %1 = vector.load %arg4[%c0_2, %c0_3, %c0_4] : memref<2x16x128xbf16, #tpu.memory_space<vmem>>, vector<2x16x128xbf16>
    %2 = arith.extf %1 : vector<2x16x128xbf16> to vector<2x16x128xf32>
    %c0_5 = arith.constant 0 : index
    %c0_6 = arith.constant 0 : index
    %3 = vector.load %arg2[%c0_5, %c0_6] : memref<1x128xf32, #tpu.memory_space<vmem>>, vector<1x128xf32>
    %4 = vector.shape_cast %3 : vector<1x128xf32> to vector<128xf32>
    %5 = vector.shape_cast %4 : vector<128xf32> to vector<1x1x128xf32>
    %6 = vector.broadcast %5 : vector<1x1x128xf32> to vector<2x16x128xf32>
    %7 = arith.mulf %0, %6 : vector<2x16x128xf32>
    %c0_7 = arith.constant 0 : index
    %c0_8 = arith.constant 0 : index
    %8 = vector.load %arg3[%c0_7, %c0_8] : memref<1x128xf32, #tpu.memory_space<vmem>>, vector<1x128xf32>
    %9 = vector.shape_cast %8 : vector<1x128xf32> to vector<128xf32>
    %10 = vector.shape_cast %9 : vector<128xf32> to vector<1x1x128xf32>
    %11 = vector.broadcast %10 : vector<1x1x128xf32> to vector<2x16x128xf32>
    %12 = arith.addf %7, %11 : vector<2x16x128xf32>
    %cst = arith.constant 0.000000e+00 : f32
    %13 = vector.broadcast %cst : f32 to vector<2x16x128xf32>
    %14 = arith.maximumf %12, %13 : vector<2x16x128xf32>
    %c0_9 = arith.constant 0 : index
    %c0_10 = arith.constant 0 : index
    %15 = vector.load %arg5[%c0_9, %c0_10] : memref<1x128xf32, #tpu.memory_space<vmem>>, vector<1x128xf32>
    %16 = vector.shape_cast %15 : vector<1x128xf32> to vector<128xf32>
    %17 = vector.shape_cast %16 : vector<128xf32> to vector<1x1x128xf32>
    %18 = vector.broadcast %17 : vector<1x1x128xf32> to vector<2x16x128xf32>
    %19 = arith.mulf %2, %18 : vector<2x16x128xf32>
    %c0_11 = arith.constant 0 : index
    %c0_12 = arith.constant 0 : index
    %20 = vector.load %arg6[%c0_11, %c0_12] : memref<1x128xf32, #tpu.memory_space<vmem>>, vector<1x128xf32>
    %21 = vector.shape_cast %20 : vector<1x128xf32> to vector<128xf32>
    %22 = vector.shape_cast %21 : vector<128xf32> to vector<1x1x128xf32>
    %23 = vector.broadcast %22 : vector<1x1x128xf32> to vector<2x16x128xf32>
    %24 = arith.addf %19, %23 : vector<2x16x128xf32>
    %cst_13 = arith.constant 0.000000e+00 : f32
    %25 = vector.broadcast %cst_13 : f32 to vector<2x16x128xf32>
    %26 = arith.maximumf %24, %25 : vector<2x16x128xf32>
    %27 = arith.addf %14, %26 : vector<2x16x128xf32>
    %c0_14 = arith.constant 0 : index
    %c0_15 = arith.constant 0 : index
    %c0_16 = arith.constant 0 : index
    %28 = vector.load %arg7[%c0_14, %c0_15, %c0_16] : memref<2x16x128xf32, #tpu.memory_space<vmem>>, vector<2x16x128xf32>
    tpu.vector_store %arg7[%c0_14, %c0_15, %c0_16], %27 {strides = array<i32>} : memref<2x16x128xf32, #tpu.memory_space<vmem>>, vector<2x16x128xf32>,
    return
  }
  func.func @transform_0(%arg0: i32) -> (i32, i32, i32) {
    %c0_i32 = arith.constant 0 : i32
    %c0_i32_0 = arith.constant 0 : i32
    %c0_i32_1 = arith.constant 0 : i32
    return %arg0, %c0_i32, %c0_i32_0 : i32, i32, i32
  }
  func.func @transform_1(%arg0: i32) -> (i32, i32) {
    %c0_i32 = arith.constant 0 : i32
    %c0_i32_0 = arith.constant 0 : i32
    %c0_i32_1 = arith.constant 0 : i32
    return %c0_i32, %c0_i32_0 : i32, i32
  }
  func.func @transform_2(%arg0: i32) -> (i32, i32) {
    %c0_i32 = arith.constant 0 : i32
    %c0_i32_0 = arith.constant 0 : i32
    %c0_i32_1 = arith.constant 0 : i32
    return %c0_i32, %c0_i32_0 : i32, i32
  }
  func.func @transform_3(%arg0: i32) -> (i32, i32, i32) {
    %c0_i32 = arith.constant 0 : i32
    %c0_i32_0 = arith.constant 0 : i32
    %c0_i32_1 = arith.constant 0 : i32
    return %arg0, %c0_i32, %c0_i32_0 : i32, i32, i32
  }
  func.func @transform_4(%arg0: i32) -> (i32, i32) {
    %c0_i32 = arith.constant 0 : i32
    %c0_i32_0 = arith.constant 0 : i32
    %c0_i32_1 = arith.constant 0 : i32
    return %c0_i32, %c0_i32_0 : i32, i32
  }
  func.func @transform_5(%arg0: i32) -> (i32, i32) {
    %c0_i32 = arith.constant 0 : i32
    %c0_i32_0 = arith.constant 0 : i32
    %c0_i32_1 = arith.constant 0 : i32
    return %c0_i32, %c0_i32_0 : i32, i32
  }
  func.func @transform_6(%arg0: i32) -> (i32, i32, i32) {
    %c0_i32 = arith.constant 0 : i32
    %c0_i32_0 = arith.constant 0 : i32
    %c0_i32_1 = arith.constant 0 : i32
    return %arg0, %c0_i32, %c0_i32_0 : i32, i32, i32
  }
}

</mosaic_0001>

<llo_original>
// kernel: tile.45
$region0: #{tile.45}
  #allocation0 [shape = 's32[1]{0}', space=sflag, size = 0x4, scoped, tag = 'scoped memory for tile.45']
  %s0 = inlined_call_operand.vmem [shape: f32[8], index: 0, kind: input, shape index: {}]
  %s1 = inlined_call_operand.vmem [shape: f32[16,8], index: 1, kind: output, shape index: {}]
  // Predicated region
  $region2: #{tile.45} parent=0 // pred_check
    _
  $region3: #{tile.45} parent=0 // pred_check_branch
    %3 = sbr.rel (0) target = $region5
  $region4: #{tile.45} parent=0 // pred_region
    _
  $region5: #{tile.45} parent=0 // pred_fallthru
    _
  %v4 = vld [vmem:[%s0] ss:$0 sm:$0xff]
  %5 = vst [vmem:[%s1] sm:$0xff] %v4
  %s6 = scalar_lea.vmem %s1, 8
  %7 = vst [vmem:[%s6] sm:$0xff] %v4

// kernel: tile.59
$region0: #{tile.59}
  %s0 = inlined_call_operand.vmem [shape: f32[16,8], index: 0, kind: input, shape index: {}]
  %s1 = inlined_call_operand.vmem [shape: f32[1,128], index: 1, kind: output, shape index: {}]
  $region1: #{tile.59} parent=0
    #allocation0 [shape = 'u8[4096]{0}', space=vmem, size = 0x1000, scoped, tag = 'scoped mem for output reshape']
    %v2 = vld [vmem:[%s0] sm:$0x1]
    %vm3 = vcmask 64512
    %4 = vst.msk [vmem:[#allocation0] sm:$0x1] %vm3, %v2
    %s5 = scalar_lea.vmem %s0, 15
    %v6 = vld [vmem:[%s5] sm:$0x1]
    %7 = vrot.lane.b32.xlu0 %v6, 120
    %v8 = vpop.permute.xlu0 %7
    %vm9 = vcmask 1048512
    %10 = vst.msk [vmem:[#allocation0] sm:$0x1] %vm9, %v8
    %s11 = scalar_lea.vmem %s0, 14
    %v12 = vld [vmem:[%s11] sm:$0x1]
    %13 = vrot.lane.b32.xlu0 %v12, 112
    %v14 = vpop.permute.xlu0 %13
    %vm15 = vcmask 982912
    %16 = vst.msk [vmem:[#allocation0] sm:$0x1] %vm15, %v14
    %s17 = scalar_lea.vmem %s0, 13
    %v18 = vld [vmem:[%s17] sm:$0x1]
    %19 = vrot.lane.b32.xlu0 %v18, 104
    %v20 = vpop.permute.xlu0 %19
    %vm21 = vcmask 917312
    %22 = vst.msk [vmem:[#allocation0] sm:$0x1] %vm21, %v20
    %s23 = scalar_lea.vmem %s0, 12
    %v24 = vld [vmem:[%s23] sm:$0x1]
    %25 = vrot.lane.b32.xlu0 %v24, 96
    %v26 = vpop.permute.xlu0 %25
    %vm27 = vcmask 851712
    %28 = vst.msk [vmem:[#allocation0] sm:$0x1] %vm27, %v26
    %s29 = scalar_lea.vmem %s0, 11
    %v30 = vld [vmem:[%s29] sm:$0x1]
    %31 = vrot.lane.b32.xlu0 %v30, 88
    %v32 = vpop.permute.xlu0 %31
    %vm33 = vcmask 786112
    %34 = vst.msk [vmem:[#allocation0] sm:$0x1] %vm33, %v32
    %s35 = scalar_lea.vmem %s0, 10
    %v36 = vld [vmem:[%s35] sm:$0x1]
    %37 = vrot.lane.b32.xlu0 %v36, 80
    %v38 = vpop.permute.xlu0 %37
    %vm39 = vcmask 720512
    %40 = vst.msk [vmem:[#allocation0] sm:$0x1] %vm39, %v38
    %s41 = scalar_lea.vmem %s0, 9
    %v42 = vld [vmem:[%s41] sm:$0x1]
    %43 = vrot.lane.b32.xlu0 %v42, 72
    %v44 = vpop.permute.xlu0 %43
    %vm45 = vcmask 654912
    %46 = vst.msk [vmem:[#allocation0] sm:$0x1] %vm45, %v44
    %s47 = scalar_lea.vmem %s0, 8
    %v48 = vld [vmem:[%s47] sm:$0x1]
    %49 = vrot.lane.b32.xlu0 %v48, 64
    %v50 = vpop.permute.xlu0 %49
    %vm51 = vcmask 589312
    %52 = vst.msk [vmem:[#allocation0] sm:$0x1] %vm51, %v50
    %s53 = scalar_lea.vmem %s0, 7
    %v54 = vld [vmem:[%s53] sm:$0x1]
    %55 = vrot.lane.b32.xlu0 %v54, 56
    %v56 = vpop.permute.xlu0 %55
    %vm57 = vcmask 523712
    %58 = vst.msk [vmem:[#allocation0] sm:$0x1] %vm57, %v56
    %s59 = scalar_lea.vmem %s0, 6
    %v60 = vld [vmem:[%s59] sm:$0x1]
    %61 = vrot.lane.b32.xlu0 %v60, 48
    %v62 = vpop.permute.xlu0 %61
    %vm63 = vcmask 458112
    %64 = vst.msk [vmem:[#allocation0] sm:$0x1] %vm63, %v62
    %s65 = scalar_lea.vmem %s0, 5
    %v66 = vld [vmem:[%s65] sm:$0x1]
    %67 = vrot.lane.b32.xlu0 %v66, 40
    %v68 = vpop.permute.xlu0 %67
    %vm69 = vcmask 392512
    %70 = vst.msk [vmem:[#allocation0] sm:$0x1] %vm69, %v68
    %s71 = scalar_lea.vmem %s0, 4
    %v72 = vld [vmem:[%s71] sm:$0x1]
    %73 = vrot.lane.b32.xlu0 %v72, 32
    %v74 = vpop.permute.xlu0 %73
    %vm75 = vcmask 326912
    %76 = vst.msk [vmem:[#allocation0] sm:$0x1] %vm75, %v74
    %s77 = scalar_lea.vmem %s0, 3
    %v78 = vld [vmem:[%s77] sm:$0x1]
    %79 = vrot.lane.b32.xlu0 %v78, 24
    %v80 = vpop.permute.xlu0 %79
    %vm81 = vcmask 261312
    %82 = vst.msk [vmem:[#allocation0] sm:$0x1] %vm81, %v80
    %s83 = scalar_lea.vmem %s0, 2
    %v84 = vld [vmem:[%s83] sm:$0x1]
    %85 = vrot.lane.b32.xlu0 %v84, 16
    %v86 = vpop.permute.xlu0 %85
    %vm87 = vcmask 195712
    %88 = vst.msk [vmem:[#allocation0] sm:$0x1] %vm87, %v86
    %s89 = scalar_lea.vmem %s0, 1
    %v90 = vld [vmem:[%s89] sm:$0x1]
    %91 = vrot.lane.b32.xlu0 %v90, 8
    %v92 = vpop.permute.xlu0 %91
    %vm93 = vcmask 130112
    %94 = vst.msk [vmem:[#allocation0] sm:$0x1] %vm93, %v92
    %s96 = sshllo.u32 0, 1
    %v98 = vld [vmem:[#allocation0] sm:%s96]
    %s99 = sshllo.u32 0, 1
    %100 = vst [vmem:[%s1] sm:%s99] %v98

// kernel: double_conv_forward.5
$region0: #{double_conv_forward.5}
  #allocation0 [shape = 'u32[]', space=smem, size = 0x4, offset = 0x4, fixed_abs, tag = 'smem constant byte address 0x4 - core index']
  #allocation1 [shape = 'u32[144,128]{1,0:T(1,128)}', space=vmem, size = 0x12000, scoped, tag = 'internal scratch']
  %s0 = inlined_call_operand.vmem [shape: f32[2,16,128], index: 0, kind: input, shape index: {}]
  %s1 = inlined_call_operand.vmem [shape: f32[1,128], index: 1, kind: input, shape index: {}]
  %s2 = inlined_call_operand.vmem [shape: f32[1,128], index: 2, kind: input, shape index: {}]
  %s3 = inlined_call_operand.vmem [shape: bf16[2,16,128], index: 3, kind: input, shape index: {}]
  %s4 = inlined_call_operand.vmem [shape: f32[1,128], index: 4, kind: input, shape index: {}]
  %s5 = inlined_call_operand.vmem [shape: f32[1,128], index: 5, kind: input, shape index: {}]
  %s6 = inlined_call_operand.vmem [shape: f32[2,16,128], index: 6, kind: output, shape index: {}]
  %s7 = sld [smem:[#allocation0]]
  $region34: #{double_conv_forward.5} parent=0
    _
  %s9 = ssub.s32 1, %s7
  %s10 = scalar_select 0, %s9, %s7
  // Predicated region
  $region2: #{double_conv_forward.5} parent=0 // pred_check
    _
  $region3: #{double_conv_forward.5} parent=0 // pred_check_branch
    %12 = sbr.rel (0) target = $region5
  $region4: #{double_conv_forward.5} parent=0 // pred_region
    _
  $region5: #{double_conv_forward.5} parent=0 // pred_fallthru
    _
  // Predicated region
  $region6: #{double_conv_forward.5} parent=0 // pred_check
    _
  $region7: #{double_conv_forward.5} parent=0 // pred_check_branch
    %14 = sbr.rel (0) target = $region9
  $region8: #{double_conv_forward.5} parent=0 // pred_region
    _
  $region9: #{double_conv_forward.5} parent=0 // pred_fallthru
    _
  // Predicated region
  $region10: #{double_conv_forward.5} parent=0 // pred_check
    _
  $region11: #{double_conv_forward.5} parent=0 // pred_check_branch
    %16 = sbr.rel (0) target = $region13
  $region12: #{double_conv_forward.5} parent=0 // pred_region
    _
  $region13: #{double_conv_forward.5} parent=0 // pred_fallthru
    _
  // Predicated region
  $region14: #{double_conv_forward.5} parent=0 // pred_check
    _
  $region15: #{double_conv_forward.5} parent=0 // pred_check_branch
    %18 = sbr.rel (0) target = $region17
  $region16: #{double_conv_forward.5} parent=0 // pred_region
    _
  $region17: #{double_conv_forward.5} parent=0 // pred_fallthru
    _
  // Predicated region
  $region18: #{double_conv_forward.5} parent=0 // pred_check
    _
  $region19: #{double_conv_forward.5} parent=0 // pred_check_branch
    %20 = sbr.rel (0) target = $region21
  $region20: #{double_conv_forward.5} parent=0 // pred_region
    _
  $region21: #{double_conv_forward.5} parent=0 // pred_fallthru
    _
  // Predicated region
  $region22: #{double_conv_forward.5} parent=0 // pred_check
    _
  $region23: #{double_conv_forward.5} parent=0 // pred_check_branch
    %22 = sbr.rel (0) target = $region25
  $region24: #{double_conv_forward.5} parent=0 // pred_region
    _
  $region25: #{double_conv_forward.5} parent=0 // pred_fallthru
    _
  %v23 = vld [vmem:[%s0] sm:$0xff]
  %v24 = vld [vmem:[%s0 + $0x8] sm:$0xff]
  %v25 = vld [vmem:[%s0 + $0x10] sm:$0xff]
  %v26 = vld [vmem:[%s0 + $0x18] sm:$0xff]
  %v27 = vld [vmem:[%s3] sm:$0xf]
  %v28 = vld [vmem:[%s3 + $0x4] sm:$0xf]
  %v29 = vld [vmem:[%s3 + $0x8] sm:$0xf]
  %v30 = vld [vmem:[%s3 + $0xc] sm:$0xf]
  %v31 = vunpack.c.l.bf16 %v27
  %v32 = vunpack.c.l.bf16 %v28
  %v33 = vunpack.c.l.bf16 %v29
  %v34 = vunpack.c.l.bf16 %v30
  %v35 = vld [vmem:[%s1] sm:$0x1]
  %v37 = vlaneseq
  %v38 = vshrl.u32 %v37, 7
  %v39 = vsub.s32 0, %v38
  %v40 = vrot.slane %v35, %v39
  %v42 = vmul.f32 %v23, %v40
  %v43 = vmul.f32 %v24, %v40
  %v44 = vmul.f32 %v25, %v40
  %v45 = vmul.f32 %v26, %v40
  %v46 = vld [vmem:[%s2] sm:$0x1]
  %v48 = vlaneseq
  %v49 = vshrl.u32 %v48, 7
  %v50 = vsub.s32 0, %v49
  %v51 = vrot.slane %v46, %v50
  %v53 = vadd.f32 %v42, %v51
  %v54 = vadd.f32 %v43, %v51
  %v55 = vadd.f32 %v44, %v51
  %v56 = vadd.f32 %v45, %v51
  %v57 = vmax.f32 %v53, 0.0
  %v58 = vmax.f32 %v54, 0.0
  %v59 = vmax.f32 %v55, 0.0
  %v60 = vmax.f32 %v56, 0.0
  %v61 = vld [vmem:[%s4] sm:$0x1]
  %v63 = vlaneseq
  %v64 = vshrl.u32 %v63, 7
  %v65 = vsub.s32 0, %v64
  %v66 = vrot.slane %v61, %v65
  %v68 = vmul.f32 %v31, %v66
  %v69 = vmul.f32 %v32, %v66
  %v70 = vmul.f32 %v33, %v66
  %v71 = vmul.f32 %v34, %v66
  %v72 = vld [vmem:[%s5] sm:$0x1]
  %v74 = vlaneseq
  %v75 = vshrl.u32 %v74, 7
  %v76 = vsub.s32 0, %v75
  %v77 = vrot.slane %v72, %v76
  %v79 = vadd.f32 %v68, %v77
  %v80 = vadd.f32 %v69, %v77
  %v81 = vadd.f32 %v70, %v77
  %v82 = vadd.f32 %v71, %v77
  %v83 = vmax.f32 %v79, 0.0
  %v84 = vmax.f32 %v80, 0.0
  %v85 = vmax.f32 %v81, 0.0
  %v86 = vmax.f32 %v82, 0.0
  %v87 = vadd.f32 %v57, %v83
  %v88 = vadd.f32 %v58, %v84
  %v89 = vadd.f32 %v59, %v85
  %v90 = vadd.f32 %v60, %v86
  %91 = vst [vmem:[%s6] sm:$0xff] %v87
  %92 = vst [vmem:[%s6 + $0x8] sm:$0xff] %v88
  %93 = vst [vmem:[%s6 + $0x10] sm:$0xff] %v89
  %94 = vst [vmem:[%s6 + $0x18] sm:$0xff] %v90
  // Predicated region
  $region26: #{double_conv_forward.5} parent=0 // pred_check
    _
  $region27: #{double_conv_forward.5} parent=0 // pred_check_branch
    %96 = sbr.rel (0) target = $region29
  $region28: #{double_conv_forward.5} parent=0 // pred_region
    _
  $region29: #{double_conv_forward.5} parent=0 // pred_fallthru
    _
  // Predicated region
  $region30: #{double_conv_forward.5} parent=0 // pred_check
    _
  $region31: #{double_conv_forward.5} parent=0 // pred_check_branch
    %98 = sbr.rel (0) target = $region33
  $region32: #{double_conv_forward.5} parent=0 // pred_region
    _
  $region33: #{double_conv_forward.5} parent=0 // pred_fallthru
    _

// kernel: double_conv_forward.3
$region0: #{double_conv_forward.3}
  #allocation0 [shape = 'u32[]', space=smem, size = 0x4, offset = 0x4, fixed_abs, tag = 'smem constant byte address 0x4 - core index']
  #allocation1 [shape = 'u32[144,128]{1,0:T(1,128)}', space=vmem, size = 0x12000, scoped, tag = 'internal scratch']
  #allocation2 [shape = 'f32[2,18,64]{2,1,0:T(8,128)}', space=vmem, size = 0x6000, scoped, tag = 'scratch operand']
  %s0 = inlined_call_operand.vmem [shape: f32[2,16,64], index: 0, kind: input, shape index: {}]
  %s1 = inlined_call_operand.vmem [shape: bf16[192,128], index: 1, kind: input, shape index: {}]
  %s2 = inlined_call_operand.vmem [shape: bf16[64,128], index: 2, kind: input, shape index: {}]
  %s3 = inlined_call_operand.vmem [shape: bf16[2,16,128], index: 3, kind: output, shape index: {0}]
  %s4 = inlined_call_operand.vmem [shape: bf16[2,16,128], index: 4, kind: output, shape index: {1}]
  %s5 = inlined_call_operand.vmem [shape: f32[1,4,128], index: 5, kind: output, shape index: {2}]
  %6 = xla_tuple %s3, %s4, %s5
  %s7 = sld [smem:[#allocation0]]
  $region38: #{double_conv_forward.3} parent=0
    _
  %s9 = ssub.s32 1, %s7
  %s10 = scalar_select 0, %s9, %s7
  // Predicated region
  $region2: #{double_conv_forward.3} parent=0 // pred_check
    _
  $region3: #{double_conv_forward.3} parent=0 // pred_check_branch
    %12 = sbr.rel (0) target = $region5
  $region4: #{double_conv_forward.3} parent=0 // pred_region
    _
  $region5: #{double_conv_forward.3} parent=0 // pred_fallthru
    _
  // Predicated region
  $region6: #{double_conv_forward.3} parent=0 // pred_check
    _
  $region7: #{double_conv_forward.3} parent=0 // pred_check_branch
    %14 = sbr.rel (0) target = $region9
  $region8: #{double_conv_forward.3} parent=0 // pred_region
    _
  $region9: #{double_conv_forward.3} parent=0 // pred_fallthru
    _
  // Predicated region
  $region10: #{double_conv_forward.3} parent=0 // pred_check
    _
  $region11: #{double_conv_forward.3} parent=0 // pred_check_branch
    %16 = sbr.rel (0) target = $region13
  $region12: #{double_conv_forward.3} parent=0 // pred_region
    _
  $region13: #{double_conv_forward.3} parent=0 // pred_fallthru
    _
  %v18 = vld [vmem:[%s0] sm:$0xff]
  %v19 = vld [vmem:[%s0 + $0x8] sm:$0xff]
  %v20 = vld [vmem:[%s0 + $0x10] sm:$0xff]
  %v21 = vld [vmem:[%s0 + $0x18] sm:$0xff]
  %vm22 = vcmask 516096
  %23 = vst.msk [vmem:[#allocation2] sm:$0x1] %vm22, 0.0
  %24 = vst.msk [vmem:[#allocation2 + $0x18] sm:$0x1] %vm22, 0.0
  %25 = vst.msk [vmem:[#allocation2 + $0x11] sm:$0x1] %vm22, 0.0
  %26 = vst.msk [vmem:[#allocation2 + $0x29] sm:$0x1] %vm22, 0.0
  %vm27 = vcmask 523264
  %28 = vst.msk [vmem:[#allocation2 + $0x1] sm:$0xff] %vm27, %v18
  %29 = vst.msk [vmem:[#allocation2 + $0x9] sm:$0xff] %vm27, %v19
  %30 = vst.msk [vmem:[#allocation2 + $0x19] sm:$0xff] %vm27, %v20
  %31 = vst.msk [vmem:[#allocation2 + $0x21] sm:$0xff] %vm27, %v21
  %v32 = vld [vmem:[#allocation2] sm:$0xff]
  %v33 = vld [vmem:[#allocation2 + $0x8] sm:$0xff]
  %v34 = vld [vmem:[#allocation2 + $0x18] sm:$0xff]
  %v35 = vld [vmem:[#allocation2 + $0x20] sm:$0xff]
  %v36 = vld [vmem:[#allocation2 + $0x1] sm:$0xff]
  %v37 = vld [vmem:[#allocation2 + $0x9] sm:$0xff]
  %v38 = vld [vmem:[#allocation2 + $0x19] sm:$0xff]
  %v39 = vld [vmem:[#allocation2 + $0x21] sm:$0xff]
  %v40 = vld [vmem:[#allocation2 + $0x2] sm:$0xff]
  %v41 = vld [vmem:[#allocation2 + $0xa] sm:$0xff]
  %v42 = vld [vmem:[#allocation2 + $0x1a] sm:$0xff]
  %v43 = vld [vmem:[#allocation2 + $0x22] sm:$0xff]
  %48 = vrot.lane.b32.xlu0 %v36, 64
  %v49 = vpop.permute.xlu0 %48
  %50 = vrot.lane.b32.xlu0 %v37, 64
  %v51 = vpop.permute.xlu0 %50
  %52 = vrot.lane.b32.xlu0 %v38, 64
  %v53 = vpop.permute.xlu0 %52
  %54 = vrot.lane.b32.xlu0 %v39, 64
  %v55 = vpop.permute.xlu0 %54
  %v60 = vsel %vm27, %v32, %v49
  %v61 = vsel %vm27, %v33, %v51
  %v62 = vsel %vm27, %v34, %v53
  %v63 = vsel %vm27, %v35, %v55
  %v64 = vpack.c.bf16 %v61, %v60
  %v65 = vpack.c.bf16 %v41, %v40
  %v66 = vpack.c.bf16 %v63, %v62
  %v67 = vpack.c.bf16 %v43, %v42
  %v68 = vld [vmem:[%s1] sm:$0xf]
  %v69 = vld [vmem:[%s1 + $0x4] sm:$0xf]
  %v70 = vld [vmem:[%s1 + $0x8] sm:$0xf]
  %v71 = vld [vmem:[%s1 + $0xc] sm:$0xf]
  %v72 = vld [vmem:[%s1 + $0x10] sm:$0xf]
  %v73 = vld [vmem:[%s1 + $0x14] sm:$0xf]
  %v74 = vld [vmem:[%s1 + $0x18] sm:$0xf]
  %v75 = vld [vmem:[%s1 + $0x1c] sm:$0xf]
  %v76 = vld [vmem:[%s1 + $0x20] sm:$0xf]
  %v77 = vld [vmem:[%s1 + $0x24] sm:$0xf]
  %v78 = vld [vmem:[%s1 + $0x28] sm:$0xf]
  %v79 = vld [vmem:[%s1 + $0x2c] sm:$0xf]
  %v80 = vld [vmem:[%s1 + $0x30] sm:$0xf]
  %v81 = vld [vmem:[%s1 + $0x34] sm:$0xf]
  %v82 = vld [vmem:[%s1 + $0x38] sm:$0xf]
  %v83 = vld [vmem:[%s1 + $0x3c] sm:$0xf]
  %v84 = vld [vmem:[%s1 + $0x40] sm:$0xf]
  %v85 = vld [vmem:[%s1 + $0x44] sm:$0xf]
  %v86 = vld [vmem:[%s1 + $0x48] sm:$0xf]
  %v87 = vld [vmem:[%s1 + $0x4c] sm:$0xf]
  %v88 = vld [vmem:[%s1 + $0x50] sm:$0xf]
  %v89 = vld [vmem:[%s1 + $0x54] sm:$0xf]
  %v90 = vld [vmem:[%s1 + $0x58] sm:$0xf]
  %v91 = vld [vmem:[%s1 + $0x5c] sm:$0xf]
  %v116 = vunpack.c.l.b16 %v68
  %v117 = vunpack.c.l.b16 %v69
  %v118 = vunpack.c.l.b16 %v70
  %v119 = vunpack.c.l.b16 %v71
  %v120 = vunpack.c.l.b16 %v72
  %v121 = vunpack.c.l.b16 %v73
  %v122 = vunpack.c.l.b16 %v74
  %v123 = vunpack.c.l.b16 %v75
  %v124 = vunpack.c.l.b16 %v76
  %v125 = vunpack.c.l.b16 %v77
  %v126 = vunpack.c.l.b16 %v78
  %v127 = vunpack.c.l.b16 %v79
  %v128 = vunpack.c.l.b16 %v80
  %v129 = vunpack.c.l.b16 %v81
  %v130 = vunpack.c.l.b16 %v82
  %v131 = vunpack.c.l.b16 %v83
  %v132 = vunpack.c.l.b16 %v84
  %v133 = vunpack.c.l.b16 %v85
  %v134 = vunpack.c.l.b16 %v86
  %v135 = vunpack.c.l.b16 %v87
  %v136 = vunpack.c.l.b16 %v88
  %v137 = vunpack.c.l.b16 %v89
  %v138 = vunpack.c.l.b16 %v90
  %v139 = vunpack.c.l.b16 %v91
  %v140 = vpack.c.b16 %v117, %v116
  %v141 = vpack.c.b16 %v119, %v118
  %v142 = vpack.c.b16 %v121, %v120
  %v143 = vpack.c.b16 %v123, %v122
  %v144 = vpack.c.b16 %v125, %v124
  %v145 = vpack.c.b16 %v127, %v126
  %v146 = vpack.c.b16 %v129, %v128
  %v147 = vpack.c.b16 %v131, %v130
  %v148 = vpack.c.b16 %v133, %v132
  %v149 = vpack.c.b16 %v135, %v134
  %v150 = vpack.c.b16 %v137, %v136
  %v151 = vpack.c.b16 %v139, %v138
  %v165 = vsel %vm27, %v65, 0
  %v168 = vsel %vm27, %v67, 0
  %170 = vmatprep.subr.bf16.mxu0 0
  %171 = vmatpush1.bf16.msra.mxu0 %v140
  %172 = vmatprep.subr.bf16.mxu0 0
  %173 = vmatpush1.bf16.msra.mxu0 %v141
  %174 = vmatprep.subr.bf16.mxu0 0
  %175 = vmatpush1.bf16.msra.mxu0 %v142
  %176 = vmatprep.subr.bf16.mxu0 0
  %177 = vmatpush1.bf16.msra.mxu0 %v143
  %178 = vmatprep.subr.bf16.mxu0 0
  %179 = vmatpush1.bf16.msra.mxu0 %v144
  %180 = vmatprep.subr.bf16.mxu0 0
  %181 = vmatpush1.bf16.msra.mxu0 %v145
  %182 = vmatprep.subr.bf16.mxu0 0
  %183 = vmatpush1.bf16.msra.mxu0 %v146
  %184 = vmatprep.subr.bf16.mxu0 0
  %185 = vmatpush1.bf16.msra.mxu0 %v147
  %186 = vmatprep.subr.bf16.mxu0 0
  %187 = vmatpush1.bf16.msra.mxu0 %v148
  %188 = vmatprep.subr.bf16.mxu0 0
  %189 = vmatpush1.bf16.msra.mxu0 %v149
  %190 = vmatprep.subr.bf16.mxu0 0
  %191 = vmatpush1.bf16.msra.mxu0 %v150
  %192 = vmatprep.subr.bf16.mxu0 0
  %193 = vmatpush1.bf16.msra.mxu0 %v151
  %194 = vmatprep.subr.bf16.mxu0 0
  %195 = vmatpush1.bf16.msra.mxu0 0
  %196 = vmatprep.subr.bf16.mxu0 0
  %197 = vmatpush1.bf16.msra.mxu0 0
  %198 = vmatprep.subr.bf16.mxu0 0
  %199 = vmatpush1.bf16.msra.mxu0 0
  %200 = vmatprep.subr.bf16.mxu0 0
  %201 = vmatpush1.bf16.msra.mxu0 0
  %202 = vmatprep.mubr.bf16.mxu0 %v165
  %203 = vmatmul.mubr.bf16.gmra.mrb[0].mxu0 %v64
  %v204 = vpop.f32.mrb[0].mxu0
  %v205 = vadd.f32 0.0, %v204
  %v206 = vpop.f32.mrb[0].mxu0
  %v207 = vpop.f32.mrb[0].mxu0
  %v208 = vadd.f32 0.0, %v207
  %v209 = vpop.f32.mrb[0].mxu0
  %210 = vmatprep.mubr.bf16.mxu0 %v168
  %211 = vmatmul.mubr.bf16.gmra.mrb[0].mxu0 %v66
  %v212 = vpop.f32.mrb[0].mxu0
  %v213 = vadd.f32 0.0, %v212
  %v214 = vpop.f32.mrb[0].mxu0
  %v215 = vpop.f32.mrb[0].mxu0
  %v216 = vadd.f32 0.0, %v215
  %v217 = vpop.f32.mrb[0].mxu0
  %218 = vdwg.mxu0
  %v219 = vpack.c.bf16 %v19, %v18
  %v220 = vpack.c.bf16 %v21, %v20
  %v221 = vld [vmem:[%s2] sm:$0xf]
  %v222 = vld [vmem:[%s2 + $0x4] sm:$0xf]
  %v223 = vld [vmem:[%s2 + $0x8] sm:$0xf]
  %v224 = vld [vmem:[%s2 + $0xc] sm:$0xf]
  %v225 = vld [vmem:[%s2 + $0x10] sm:$0xf]
  %v226 = vld [vmem:[%s2 + $0x14] sm:$0xf]
  %v227 = vld [vmem:[%s2 + $0x18] sm:$0xf]
  %v228 = vld [vmem:[%s2 + $0x1c] sm:$0xf]
  %v237 = vunpack.c.l.b16 %v221
  %v238 = vunpack.c.l.b16 %v222
  %v239 = vunpack.c.l.b16 %v223
  %v240 = vunpack.c.l.b16 %v224
  %v241 = vunpack.c.l.b16 %v225
  %v242 = vunpack.c.l.b16 %v226
  %v243 = vunpack.c.l.b16 %v227
  %v244 = vunpack.c.l.b16 %v228
  %v245 = vpack.c.b16 %v238, %v237
  %v246 = vpack.c.b16 %v240, %v239
  %v247 = vpack.c.b16 %v242, %v241
  %v248 = vpack.c.b16 %v244, %v243
  %v254 = vsel %vm27, %v219, 0
  %v257 = vsel %vm27, %v220, 0
  %259 = vmatprep.subr.bf16.mxu0 0
  %260 = vmatpush1.bf16.msra.mxu0 %v245
  %261 = vmatprep.subr.bf16.mxu0 0
  %262 = vmatpush1.bf16.msra.mxu0 %v246
  %263 = vmatprep.subr.bf16.mxu0 0
  %264 = vmatpush1.bf16.msra.mxu0 %v247
  %265 = vmatprep.subr.bf16.mxu0 0
  %266 = vmatpush1.bf16.msra.mxu0 %v248
  %267 = vmatprep.subr.bf16.mxu0 0
  %268 = vmatpush1.bf16.msra.mxu0 0
  %269 = vmatprep.subr.bf16.mxu0 0
  %270 = vmatpush1.bf16.msra.mxu0 0
  %271 = vmatprep.subr.bf16.mxu0 0
  %272 = vmatpush1.bf16.msra.mxu0 0
  %273 = vmatprep.subr.bf16.mxu0 0
  %274 = vmatpush1.bf16.msra.mxu0 0
  %275 = vmatprep.subr.bf16.mxu0 0
  %276 = vmatpush1.bf16.msra.mxu0 0
  %277 = vmatprep.subr.bf16.mxu0 0
  %278 = vmatpush1.bf16.msra.mxu0 0
  %279 = vmatprep.subr.bf16.mxu0 0
  %280 = vmatpush1.bf16.msra.mxu0 0
  %281 = vmatprep.subr.bf16.mxu0 0
  %282 = vmatpush1.bf16.msra.mxu0 0
  %283 = vmatprep.subr.bf16.mxu0 0
  %284 = vmatpush1.bf16.msra.mxu0 0
  %285 = vmatprep.subr.bf16.mxu0 0
  %286 = vmatpush1.bf16.msra.mxu0 0
  %287 = vmatprep.subr.bf16.mxu0 0
  %288 = vmatpush1.bf16.msra.mxu0 0
  %289 = vmatprep.subr.bf16.mxu0 0
  %290 = vmatpush1.bf16.msra.mxu0 0
  %291 = vmatprep.mubr.bf16.mxu0 0
  %292 = vmatmul.mubr.bf16.gmra.mrb[0].mxu0 %v254
  %v293 = vpop.f32.mrb[0].mxu0
  %v294 = vadd.f32 0.0, %v293
  %v295 = vpop.f32.mrb[0].mxu0
  %v296 = vpop.f32.mrb[0].mxu0
  %v297 = vadd.f32 0.0, %v296
  %v298 = vpop.f32.mrb[0].mxu0
  %299 = vmatprep.mubr.bf16.mxu0 0
  %300 = vmatmul.mubr.bf16.gmra.mrb[0].mxu0 %v257
  %v301 = vpop.f32.mrb[0].mxu0
  %v302 = vadd.f32 0.0, %v301
  %v303 = vpop.f32.mrb[0].mxu0
  %v304 = vpop.f32.mrb[0].mxu0
  %v305 = vadd.f32 0.0, %v304
  %v306 = vpop.f32.mrb[0].mxu0
  %307 = vdwg.mxu0
  %v308 = vpack.c.bf16 %v208, %v205
  %v309 = vpack.c.bf16 %v216, %v213
  %v312 = vunpack.c.l.b16 %v308
  %v313 = vunpack.c.h.b16 %v308
  %v314 = vunpack.c.l.b16 %v309
  %v315 = vunpack.c.h.b16 %v309
  %v316 = vpack.c.b16 %v312, %v312
  %v317 = vpack.c.b16 %v313, %v313
  %v318 = vpack.c.b16 %v314, %v314
  %v319 = vpack.c.b16 %v315, %v315
  %324 = vst [vmem:[%s3] sm:$0xf] %v316
  %325 = vst [vmem:[%s3 + $0x4] sm:$0xf] %v317
  %326 = vst [vmem:[%s3 + $0x8] sm:$0xf] %v318
  %327 = vst [vmem:[%s3 + $0xc] sm:$0xf] %v319
  %v328 = vpack.c.bf16 %v297, %v294
  %v329 = vpack.c.bf16 %v305, %v302
  %v332 = vunpack.c.l.b16 %v328
  %v333 = vunpack.c.h.b16 %v328
  %v334 = vunpack.c.l.b16 %v329
  %v335 = vunpack.c.h.b16 %v329
  %v336 = vpack.c.b16 %v332, %v332
  %v337 = vpack.c.b16 %v333, %v333
  %v338 = vpack.c.b16 %v334, %v334
  %v339 = vpack.c.b16 %v335, %v335
  %344 = vst [vmem:[%s4] sm:$0xf] %v336
  %345 = vst [vmem:[%s4 + $0x4] sm:$0xf] %v337
  %346 = vst [vmem:[%s4 + $0x8] sm:$0xf] %v338
  %347 = vst [vmem:[%s4 + $0xc] sm:$0xf] %v339
  %v348 = vadd.f32 %v205, %v208
  %v349 = vadd.f32 %v348, %v213
  %v350 = vadd.f32 %v349, %v216
  %v351 = vrot.slane %v350, 4
  %v352 = vadd.f32 %v350, %v351
  %v353 = vrot.slane %v352, 2
  %v354 = vadd.f32 %v352, %v353
  %v355 = vrot.slane %v354, 1
  %v356 = vadd.f32 %v354, %v355
  %357 = vst [vmem:[%s5] sm:$0x1] %v356
  %v358 = vmul.f32 %v205, %v205
  %v359 = vmul.f32 %v208, %v208
  %v360 = vmul.f32 %v213, %v213
  %v361 = vmul.f32 %v216, %v216
  %v362 = vadd.f32 %v358, %v359
  %v363 = vadd.f32 %v362, %v360
  %v364 = vadd.f32 %v363, %v361
  %v365 = vrot.slane %v364, 4
  %v366 = vadd.f32 %v364, %v365
  %v367 = vrot.slane %v366, 2
  %v368 = vadd.f32 %v366, %v367
  %v369 = vrot.slane %v368, 1
  %v370 = vadd.f32 %v368, %v369
  %371 = vst [vmem:[%s5 + $0x1] sm:$0x1] %v370
  %v372 = vadd.f32 %v294, %v297
  %v373 = vadd.f32 %v372, %v302
  %v374 = vadd.f32 %v373, %v305
  %v375 = vrot.slane %v374, 4
  %v376 = vadd.f32 %v374, %v375
  %v377 = vrot.slane %v376, 2
  %v378 = vadd.f32 %v376, %v377
  %v379 = vrot.slane %v378, 1
  %v380 = vadd.f32 %v378, %v379
  %381 = vst [vmem:[%s5 + $0x2] sm:$0x1] %v380
  %v382 = vmul.f32 %v294, %v294
  %v383 = vmul.f32 %v297, %v297
  %v384 = vmul.f32 %v302, %v302
  %v385 = vmul.f32 %v305, %v305
  %v386 = vadd.f32 %v382, %v383
  %v387 = vadd.f32 %v386, %v384
  %v388 = vadd.f32 %v387, %v385
  %v389 = vrot.slane %v388, 4
  %v390 = vadd.f32 %v388, %v389
  %v391 = vrot.slane %v390, 2
  %v392 = vadd.f32 %v390, %v391
  %v393 = vrot.slane %v392, 1
  %v394 = vadd.f32 %v392, %v393
  %395 = vst [vmem:[%s5 + $0x3] sm:$0x1] %v394
  // Predicated region
  $region14: #{double_conv_forward.3} parent=0 // pred_check
    _
  $region15: #{double_conv_forward.3} parent=0 // pred_check_branch
    %397 = sbr.rel (0) target = $region17
  $region16: #{double_conv_forward.3} parent=0 // pred_region
    _
  $region17: #{double_conv_forward.3} parent=0 // pred_fallthru
    _
  // Predicated region
  $region18: #{double_conv_forward.3} parent=0 // pred_check
    _
  $region19: #{double_conv_forward.3} parent=0 // pred_check_branch
    %399 = sbr.rel (0) target = $region21
  $region20: #{double_conv_forward.3} parent=0 // pred_region
    _
  $region21: #{double_conv_forward.3} parent=0 // pred_fallthru
    _
  // Predicated region
  $region22: #{double_conv_forward.3} parent=0 // pred_check
    _
  $region23: #{double_conv_forward.3} parent=0 // pred_check_branch
    %401 = sbr.rel (0) target = $region25
  $region24: #{double_conv_forward.3} parent=0 // pred_region
    _
  $region25: #{double_conv_forward.3} parent=0 // pred_fallthru
    _
  // Predicated region
  $region26: #{double_conv_forward.3} parent=0 // pred_check
    _
  $region27: #{double_conv_forward.3} parent=0 // pred_check_branch
    %403 = sbr.rel (0) target = $region29
  $region28: #{double_conv_forward.3} parent=0 // pred_region
    _
  $region29: #{double_conv_forward.3} parent=0 // pred_fallthru
    _
  // Predicated region
  $region30: #{double_conv_forward.3} parent=0 // pred_check
    _
  $region31: #{double_conv_forward.3} parent=0 // pred_check_branch
    %405 = sbr.rel (0) target = $region33
  $region32: #{double_conv_forward.3} parent=0 // pred_region
    _
  $region33: #{double_conv_forward.3} parent=0 // pred_fallthru
    _
  // Predicated region
  $region34: #{double_conv_forward.3} parent=0 // pred_check
    _
  $region35: #{double_conv_forward.3} parent=0 // pred_check_branch
    %407 = sbr.rel (0) target = $region37
  $region36: #{double_conv_forward.3} parent=0 // pred_region
    _
  $region37: #{double_conv_forward.3} parent=0 // pred_fallthru
    _

// kernel: double_conv_forward.4
$region0: #{double_conv_forward.4}
  #allocation0 [shape = 'u32[]', space=smem, size = 0x4, offset = 0x4, fixed_abs, tag = 'smem constant byte address 0x4 - core index']
  #allocation1 [shape = 'u32[144,128]{1,0:T(1,128)}', space=vmem, size = 0x12000, scoped, tag = 'internal scratch']
  #allocation2 [shape = 'f32[2,18,128]{2,1,0:T(8,128)}', space=vmem, size = 0x6000, scoped, tag = 'scratch operand']
  %s0 = inlined_call_operand.vmem [shape: bf16[2,16,128], index: 0, kind: input, shape index: {}]
  %s1 = inlined_call_operand.vmem [shape: f32[1,128], index: 1, kind: input, shape index: {}]
  %s2 = inlined_call_operand.vmem [shape: f32[1,128], index: 2, kind: input, shape index: {}]
  %s3 = inlined_call_operand.vmem [shape: bf16[384,128], index: 3, kind: input, shape index: {}]
  %s4 = inlined_call_operand.vmem [shape: f32[2,16,128], index: 4, kind: output, shape index: {0}]
  %s5 = inlined_call_operand.vmem [shape: f32[1,2,128], index: 5, kind: output, shape index: {1}]
  %6 = xla_tuple %s4, %s5
  %s7 = sld [smem:[#allocation0]]
  $region34: #{double_conv_forward.4} parent=0
    _
  %s9 = ssub.s32 1, %s7
  %s10 = scalar_select 0, %s9, %s7
  // Predicated region
  $region2: #{double_conv_forward.4} parent=0 // pred_check
    _
  $region3: #{double_conv_forward.4} parent=0 // pred_check_branch
    %12 = sbr.rel (0) target = $region5
  $region4: #{double_conv_forward.4} parent=0 // pred_region
    _
  $region5: #{double_conv_forward.4} parent=0 // pred_fallthru
    _
  // Predicated region
  $region6: #{double_conv_forward.4} parent=0 // pred_check
    _
  $region7: #{double_conv_forward.4} parent=0 // pred_check_branch
    %14 = sbr.rel (0) target = $region9
  $region8: #{double_conv_forward.4} parent=0 // pred_region
    _
  $region9: #{double_conv_forward.4} parent=0 // pred_fallthru
    _
  // Predicated region
  $region10: #{double_conv_forward.4} parent=0 // pred_check
    _
  $region11: #{double_conv_forward.4} parent=0 // pred_check_branch
    %16 = sbr.rel (0) target = $region13
  $region12: #{double_conv_forward.4} parent=0 // pred_region
    _
  $region13: #{double_conv_forward.4} parent=0 // pred_fallthru
    _
  // Predicated region
  $region14: #{double_conv_forward.4} parent=0 // pred_check
    _
  $region15: #{double_conv_forward.4} parent=0 // pred_check_branch
    %18 = sbr.rel (0) target = $region17
  $region16: #{double_conv_forward.4} parent=0 // pred_region
    _
  $region17: #{double_conv_forward.4} parent=0 // pred_fallthru
    _
  %v20 = vld [vmem:[%s0] sm:$0xf]
  %v21 = vld [vmem:[%s0 + $0x4] sm:$0xf]
  %v22 = vld [vmem:[%s0 + $0x8] sm:$0xf]
  %v23 = vld [vmem:[%s0 + $0xc] sm:$0xf]
  %v24 = vunpack.c.l.bf16 %v20
  %v25 = vunpack.c.l.bf16 %v21
  %v26 = vunpack.c.l.bf16 %v22
  %v27 = vunpack.c.l.bf16 %v23
  %v28 = vld [vmem:[%s1] sm:$0x1]
  %v30 = vlaneseq
  %v31 = vshrl.u32 %v30, 7
  %v32 = vsub.s32 0, %v31
  %v33 = vrot.slane %v28, %v32
  %v35 = vmul.f32 %v24, %v33
  %v36 = vmul.f32 %v25, %v33
  %v37 = vmul.f32 %v26, %v33
  %v38 = vmul.f32 %v27, %v33
  %v39 = vld [vmem:[%s2] sm:$0x1]
  %v41 = vlaneseq
  %v42 = vshrl.u32 %v41, 7
  %v43 = vsub.s32 0, %v42
  %v44 = vrot.slane %v39, %v43
  %v46 = vadd.f32 %v35, %v44
  %v47 = vadd.f32 %v36, %v44
  %v48 = vadd.f32 %v37, %v44
  %v49 = vadd.f32 %v38, %v44
  %v50 = vmax.f32 %v46, 0.0
  %v51 = vmax.f32 %v47, 0.0
  %v52 = vmax.f32 %v48, 0.0
  %v53 = vmax.f32 %v49, 0.0
  %54 = vst [vmem:[#allocation2] sm:$0x1] 0.0
  %55 = vst [vmem:[#allocation2 + $0x18] sm:$0x1] 0.0
  %56 = vst [vmem:[#allocation2 + $0x11] sm:$0x1] 0.0
  %57 = vst [vmem:[#allocation2 + $0x29] sm:$0x1] 0.0
  %58 = vst [vmem:[#allocation2 + $0x1] sm:$0xff] %v50
  %59 = vst [vmem:[#allocation2 + $0x9] sm:$0xff] %v51
  %60 = vst [vmem:[#allocation2 + $0x19] sm:$0xff] %v52
  %61 = vst [vmem:[#allocation2 + $0x21] sm:$0xff] %v53
  %v62 = vld [vmem:[#allocation2] sm:$0xff]
  %v63 = vld [vmem:[#allocation2 + $0x8] sm:$0xff]
  %v64 = vld [vmem:[#allocation2 + $0x18] sm:$0xff]
  %v65 = vld [vmem:[#allocation2 + $0x20] sm:$0xff]
  %v66 = vld [vmem:[#allocation2 + $0x1] sm:$0xff]
  %v67 = vld [vmem:[#allocation2 + $0x9] sm:$0xff]
  %v68 = vld [vmem:[#allocation2 + $0x19] sm:$0xff]
  %v69 = vld [vmem:[#allocation2 + $0x21] sm:$0xff]
  %v70 = vld [vmem:[#allocation2 + $0x2] sm:$0xff]
  %v71 = vld [vmem:[#allocation2 + $0xa] sm:$0xff]
  %v72 = vld [vmem:[#allocation2 + $0x1a] sm:$0xff]
  %v73 = vld [vmem:[#allocation2 + $0x22] sm:$0xff]
  %v74 = vpack.c.bf16 %v63, %v62
  %v75 = vpack.c.bf16 %v67, %v66
  %v76 = vpack.c.bf16 %v71, %v70
  %v77 = vpack.c.bf16 %v65, %v64
  %v78 = vpack.c.bf16 %v69, %v68
  %v79 = vpack.c.bf16 %v73, %v72
  %v80 = vld [vmem:[%s3] sm:$0xf]
  %v81 = vld [vmem:[%s3 + $0x4] sm:$0xf]
  %v82 = vld [vmem:[%s3 + $0x8] sm:$0xf]
  %v83 = vld [vmem:[%s3 + $0xc] sm:$0xf]
  %v84 = vld [vmem:[%s3 + $0x10] sm:$0xf]
  %v85 = vld [vmem:[%s3 + $0x14] sm:$0xf]
  %v86 = vld [vmem:[%s3 + $0x18] sm:$0xf]
  %v87 = vld [vmem:[%s3 + $0x1c] sm:$0xf]
  %v88 = vld [vmem:[%s3 + $0x20] sm:$0xf]
  %v89 = vld [vmem:[%s3 + $0x24] sm:$0xf]
  %v90 = vld [vmem:[%s3 + $0x28] sm:$0xf]
  %v91 = vld [vmem:[%s3 + $0x2c] sm:$0xf]
  %v92 = vld [vmem:[%s3 + $0x30] sm:$0xf]
  %v93 = vld [vmem:[%s3 + $0x34] sm:$0xf]
  %v94 = vld [vmem:[%s3 + $0x38] sm:$0xf]
  %v95 = vld [vmem:[%s3 + $0x3c] sm:$0xf]
  %v96 = vld [vmem:[%s3 + $0x40] sm:$0xf]
  %v97 = vld [vmem:[%s3 + $0x44] sm:$0xf]
  %v98 = vld [vmem:[%s3 + $0x48] sm:$0xf]
  %v99 = vld [vmem:[%s3 + $0x4c] sm:$0xf]
  %v100 = vld [vmem:[%s3 + $0x50] sm:$0xf]
  %v101 = vld [vmem:[%s3 + $0x54] sm:$0xf]
  %v102 = vld [vmem:[%s3 + $0x58] sm:$0xf]
  %v103 = vld [vmem:[%s3 + $0x5c] sm:$0xf]
  %v104 = vld [vmem:[%s3 + $0x60] sm:$0xf]
  %v105 = vld [vmem:[%s3 + $0x64] sm:$0xf]
  %v106 = vld [vmem:[%s3 + $0x68] sm:$0xf]
  %v107 = vld [vmem:[%s3 + $0x6c] sm:$0xf]
  %v108 = vld [vmem:[%s3 + $0x70] sm:$0xf]
  %v109 = vld [vmem:[%s3 + $0x74] sm:$0xf]
  %v110 = vld [vmem:[%s3 + $0x78] sm:$0xf]
  %v111 = vld [vmem:[%s3 + $0x7c] sm:$0xf]
  %v112 = vld [vmem:[%s3 + $0x80] sm:$0xf]
  %v113 = vld [vmem:[%s3 + $0x84] sm:$0xf]
  %v114 = vld [vmem:[%s3 + $0x88] sm:$0xf]
  %v115 = vld [vmem:[%s3 + $0x8c] sm:$0xf]
  %v116 = vld [vmem:[%s3 + $0x90] sm:$0xf]
  %v117 = vld [vmem:[%s3 + $0x94] sm:$0xf]
  %v118 = vld [vmem:[%s3 + $0x98] sm:$0xf]
  %v119 = vld [vmem:[%s3 + $0x9c] sm:$0xf]
  %v120 = vld [vmem:[%s3 + $0xa0] sm:$0xf]
  %v121 = vld [vmem:[%s3 + $0xa4] sm:$0xf]
  %v122 = vld [vmem:[%s3 + $0xa8] sm:$0xf]
  %v123 = vld [vmem:[%s3 + $0xac] sm:$0xf]
  %v124 = vld [vmem:[%s3 + $0xb0] sm:$0xf]
  %v125 = vld [vmem:[%s3 + $0xb4] sm:$0xf]
  %v126 = vld [vmem:[%s3 + $0xb8] sm:$0xf]
  %v127 = vld [vmem:[%s3 + $0xbc] sm:$0xf]
  %v176 = vunpack.c.l.b16 %v80
  %v177 = vunpack.c.l.b16 %v81
  %v178 = vunpack.c.l.b16 %v82
  %v179 = vunpack.c.l.b16 %v83
  %v180 = vunpack.c.l.b16 %v84
  %v181 = vunpack.c.l.b16 %v85
  %v182 = vunpack.c.l.b16 %v86
  %v183 = vunpack.c.l.b16 %v87
  %v184 = vunpack.c.l.b16 %v88
  %v185 = vunpack.c.l.b16 %v89
  %v186 = vunpack.c.l.b16 %v90
  %v187 = vunpack.c.l.b16 %v91
  %v188 = vunpack.c.l.b16 %v92
  %v189 = vunpack.c.l.b16 %v93
  %v190 = vunpack.c.l.b16 %v94
  %v191 = vunpack.c.l.b16 %v95
  %v192 = vunpack.c.l.b16 %v96
  %v193 = vunpack.c.l.b16 %v97
  %v194 = vunpack.c.l.b16 %v98
  %v195 = vunpack.c.l.b16 %v99
  %v196 = vunpack.c.l.b16 %v100
  %v197 = vunpack.c.l.b16 %v101
  %v198 = vunpack.c.l.b16 %v102
  %v199 = vunpack.c.l.b16 %v103
  %v200 = vunpack.c.l.b16 %v104
  %v201 = vunpack.c.l.b16 %v105
  %v202 = vunpack.c.l.b16 %v106
  %v203 = vunpack.c.l.b16 %v107
  %v204 = vunpack.c.l.b16 %v108
  %v205 = vunpack.c.l.b16 %v109
  %v206 = vunpack.c.l.b16 %v110
  %v207 = vunpack.c.l.b16 %v111
  %v208 = vunpack.c.l.b16 %v112
  %v209 = vunpack.c.l.b16 %v113
  %v210 = vunpack.c.l.b16 %v114
  %v211 = vunpack.c.l.b16 %v115
  %v212 = vunpack.c.l.b16 %v116
  %v213 = vunpack.c.l.b16 %v117
  %v214 = vunpack.c.l.b16 %v118
  %v215 = vunpack.c.l.b16 %v119
  %v216 = vunpack.c.l.b16 %v120
  %v217 = vunpack.c.l.b16 %v121
  %v218 = vunpack.c.l.b16 %v122
  %v219 = vunpack.c.l.b16 %v123
  %v220 = vunpack.c.l.b16 %v124
  %v221 = vunpack.c.l.b16 %v125
  %v222 = vunpack.c.l.b16 %v126
  %v223 = vunpack.c.l.b16 %v127
  %v224 = vpack.c.b16 %v177, %v176
  %v225 = vpack.c.b16 %v179, %v178
  %v226 = vpack.c.b16 %v181, %v180
  %v227 = vpack.c.b16 %v183, %v182
  %v228 = vpack.c.b16 %v185, %v184
  %v229 = vpack.c.b16 %v187, %v186
  %v230 = vpack.c.b16 %v189, %v188
  %v231 = vpack.c.b16 %v191, %v190
  %v232 = vpack.c.b16 %v193, %v192
  %v233 = vpack.c.b16 %v195, %v194
  %v234 = vpack.c.b16 %v197, %v196
  %v235 = vpack.c.b16 %v199, %v198
  %v236 = vpack.c.b16 %v201, %v200
  %v237 = vpack.c.b16 %v203, %v202
  %v238 = vpack.c.b16 %v205, %v204
  %v239 = vpack.c.b16 %v207, %v206
  %v240 = vpack.c.b16 %v209, %v208
  %v241 = vpack.c.b16 %v211, %v210
  %v242 = vpack.c.b16 %v213, %v212
  %v243 = vpack.c.b16 %v215, %v214
  %v244 = vpack.c.b16 %v217, %v216
  %v245 = vpack.c.b16 %v219, %v218
  %v246 = vpack.c.b16 %v221, %v220
  %v247 = vpack.c.b16 %v223, %v222
  %272 = vmatprep.subr.bf16.mxu0 0
  %273 = vmatpush1.bf16.msra.mxu0 %v224
  %274 = vmatprep.subr.bf16.mxu0 0
  %275 = vmatpush1.bf16.msra.mxu0 %v225
  %276 = vmatprep.subr.bf16.mxu0 0
  %277 = vmatpush1.bf16.msra.mxu0 %v226
  %278 = vmatprep.subr.bf16.mxu0 0
  %279 = vmatpush1.bf16.msra.mxu0 %v227
  %280 = vmatprep.subr.bf16.mxu0 0
  %281 = vmatpush1.bf16.msra.mxu0 %v228
  %282 = vmatprep.subr.bf16.mxu0 0
  %283 = vmatpush1.bf16.msra.mxu0 %v229
  %284 = vmatprep.subr.bf16.mxu0 0
  %285 = vmatpush1.bf16.msra.mxu0 %v230
  %286 = vmatprep.subr.bf16.mxu0 0
  %287 = vmatpush1.bf16.msra.mxu0 %v231
  %288 = vmatprep.subr.bf16.mxu0 0
  %289 = vmatpush1.bf16.msra.mxu0 %v232
  %290 = vmatprep.subr.bf16.mxu0 0
  %291 = vmatpush1.bf16.msra.mxu0 %v233
  %292 = vmatprep.subr.bf16.mxu0 0
  %293 = vmatpush1.bf16.msra.mxu0 %v234
  %294 = vmatprep.subr.bf16.mxu0 0
  %295 = vmatpush1.bf16.msra.mxu0 %v235
  %296 = vmatprep.subr.bf16.mxu0 0
  %297 = vmatpush1.bf16.msra.mxu0 %v236
  %298 = vmatprep.subr.bf16.mxu0 0
  %299 = vmatpush1.bf16.msra.mxu0 %v237
  %300 = vmatprep.subr.bf16.mxu0 0
  %301 = vmatpush1.bf16.msra.mxu0 %v238
  %302 = vmatprep.subr.bf16.mxu0 0
  %303 = vmatpush1.bf16.msra.mxu0 %v239
  %304 = vmatprep.mubr.bf16.mxu0 %v75
  %305 = vmatmul.mubr.bf16.gmra.mrb[0].mxu0 %v74
  %v306 = vpop.f32.mrb[0].mxu0
  %v307 = vadd.f32 0.0, %v306
  %v308 = vpop.f32.mrb[0].mxu0
  %v309 = vpop.f32.mrb[0].mxu0
  %v310 = vadd.f32 0.0, %v309
  %v311 = vpop.f32.mrb[0].mxu0
  %312 = vmatprep.mubr.bf16.mxu0 %v78
  %313 = vmatmul.mubr.bf16.gmra.mrb[0].mxu0 %v77
  %v314 = vpop.f32.mrb[0].mxu0
  %v315 = vadd.f32 0.0, %v314
  %v316 = vpop.f32.mrb[0].mxu0
  %v317 = vpop.f32.mrb[0].mxu0
  %v318 = vadd.f32 0.0, %v317
  %v319 = vpop.f32.mrb[0].mxu0
  %320 = vdwg.mxu0
  %321 = vmatprep.subr.bf16.mxu0 0
  %322 = vmatpush1.bf16.msra.mxu0 %v240
  %323 = vmatprep.subr.bf16.mxu0 0
  %324 = vmatpush1.bf16.msra.mxu0 %v241
  %325 = vmatprep.subr.bf16.mxu0 0
  %326 = vmatpush1.bf16.msra.mxu0 %v242
  %327 = vmatprep.subr.bf16.mxu0 0
  %328 = vmatpush1.bf16.msra.mxu0 %v243
  %329 = vmatprep.subr.bf16.mxu0 0
  %330 = vmatpush1.bf16.msra.mxu0 %v244
  %331 = vmatprep.subr.bf16.mxu0 0
  %332 = vmatpush1.bf16.msra.mxu0 %v245
  %333 = vmatprep.subr.bf16.mxu0 0
  %334 = vmatpush1.bf16.msra.mxu0 %v246
  %335 = vmatprep.subr.bf16.mxu0 0
  %336 = vmatpush1.bf16.msra.mxu0 %v247
  %337 = vmatprep.subr.bf16.mxu0 0
  %338 = vmatpush1.bf16.msra.mxu0 0
  %339 = vmatprep.subr.bf16.mxu0 0
  %340 = vmatpush1.bf16.msra.mxu0 0
  %341 = vmatprep.subr.bf16.mxu0 0
  %342 = vmatpush1.bf16.msra.mxu0 0
  %343 = vmatprep.subr.bf16.mxu0 0
  %344 = vmatpush1.bf16.msra.mxu0 0
  %345 = vmatprep.subr.bf16.mxu0 0
  %346 = vmatpush1.bf16.msra.mxu0 0
  %347 = vmatprep.subr.bf16.mxu0 0
  %348 = vmatpush1.bf16.msra.mxu0 0
  %349 = vmatprep.subr.bf16.mxu0 0
  %350 = vmatpush1.bf16.msra.mxu0 0
  %351 = vmatprep.subr.bf16.mxu0 0
  %352 = vmatpush1.bf16.msra.mxu0 0
  %353 = vmatprep.mubr.bf16.mxu0 0
  %354 = vmatmul.mubr.bf16.gmra.mrb[0].mxu0 %v76
  %v355 = vpop.f32.mrb[0].mxu0
  %v356 = vadd.f32 %v307, %v355
  %v357 = vpop.f32.mrb[0].mxu0
  %v358 = vpop.f32.mrb[0].mxu0
  %v359 = vadd.f32 %v310, %v358
  %v360 = vpop.f32.mrb[0].mxu0
  %361 = vmatprep.mubr.bf16.mxu0 0
  %362 = vmatmul.mubr.bf16.gmra.mrb[0].mxu0 %v79
  %v363 = vpop.f32.mrb[0].mxu0
  %v364 = vadd.f32 %v315, %v363
  %v365 = vpop.f32.mrb[0].mxu0
  %v366 = vpop.f32.mrb[0].mxu0
  %v367 = vadd.f32 %v318, %v366
  %v368 = vpop.f32.mrb[0].mxu0
  %369 = vdwg.mxu0
  %370 = vst [vmem:[%s4] sm:$0xff] %v356
  %371 = vst [vmem:[%s4 + $0x8] sm:$0xff] %v359
  %372 = vst [vmem:[%s4 + $0x10] sm:$0xff] %v364
  %373 = vst [vmem:[%s4 + $0x18] sm:$0xff] %v367
  %v374 = vadd.f32 %v356, %v359
  %v375 = vadd.f32 %v374, %v364
  %v376 = vadd.f32 %v375, %v367
  %v377 = vrot.slane %v376, 4
  %v378 = vadd.f32 %v376, %v377
  %v379 = vrot.slane %v378, 2
  %v380 = vadd.f32 %v378, %v379
  %v381 = vrot.slane %v380, 1
  %v382 = vadd.f32 %v380, %v381
  %383 = vst [vmem:[%s5] sm:$0x1] %v382
  %v384 = vmul.f32 %v356, %v356
  %v385 = vmul.f32 %v359, %v359
  %v386 = vmul.f32 %v364, %v364
  %v387 = vmul.f32 %v367, %v367
  %v388 = vadd.f32 %v384, %v385
  %v389 = vadd.f32 %v388, %v386
  %v390 = vadd.f32 %v389, %v387
  %v391 = vrot.slane %v390, 4
  %v392 = vadd.f32 %v390, %v391
  %v393 = vrot.slane %v392, 2
  %v394 = vadd.f32 %v392, %v393
  %v395 = vrot.slane %v394, 1
  %v396 = vadd.f32 %v394, %v395
  %397 = vst [vmem:[%s5 + $0x1] sm:$0x1] %v396
  // Predicated region
  $region18: #{double_conv_forward.4} parent=0 // pred_check
    _
  $region19: #{double_conv_forward.4} parent=0 // pred_check_branch
    %399 = sbr.rel (0) target = $region21
  $region20: #{double_conv_forward.4} parent=0 // pred_region
    _
  $region21: #{double_conv_forward.4} parent=0 // pred_fallthru
    _
  // Predicated region
  $region22: #{double_conv_forward.4} parent=0 // pred_check
    _
  $region23: #{double_conv_forward.4} parent=0 // pred_check_branch
    %401 = sbr.rel (0) target = $region25
  $region24: #{double_conv_forward.4} parent=0 // pred_region
    _
  $region25: #{double_conv_forward.4} parent=0 // pred_fallthru
    _
  // Predicated region
  $region26: #{double_conv_forward.4} parent=0 // pred_check
    _
  $region27: #{double_conv_forward.4} parent=0 // pred_check_branch
    %403 = sbr.rel (0) target = $region29
  $region28: #{double_conv_forward.4} parent=0 // pred_region
    _
  $region29: #{double_conv_forward.4} parent=0 // pred_fallthru
    _
  // Predicated region
  $region30: #{double_conv_forward.4} parent=0 // pred_check
    _
  $region31: #{double_conv_forward.4} parent=0 // pred_check_branch
    %405 = sbr.rel (0) target = $region33
  $region32: #{double_conv_forward.4} parent=0 // pred_region
    _
  $region33: #{double_conv_forward.4} parent=0 // pred_fallthru
    _

</llo_original>
